<compile_context>
chip_gen: v6e
topology: v6e:2x2x1
jax: 0.10.0
libtpu: 0.0.40
codegen_flags: <defaults>
</compile_context>

<pallas_src>
import jax
import jax.numpy as jnp
from jax import lax
from jax.experimental import pallas as pl
from jax.experimental.pallas import tpu as pltpu


def _embeddings_kernel(tok_ids_ref,     # SMEM (B*S,) int32        (scalar prefetch)
                       tok_hbm_ref,     # HBM  (V, D)              (memory_space=ANY)
                       seg_ids_ref,     # VMEM (TS, 1) int32       (chunk of segment ids)
                       seg_tab_ref,     # VMEM (3, D)              (resident)
                       pos_ref,         # VMEM (TS, D)             (chunk of positions)
                       out_ref,         # VMEM (TS, D)             (batch dim squeezed)
                       tok_buf_ref,     # VMEM scratch (2, TS, D)  double-buffered gather
                       copy_sems):      # DMA sems (2, NSEM)       semaphore ring per slot
    b = pl.program_id(0)
    c = pl.program_id(1)
    n_chunks = pl.num_programs(1)
    _, ts, _ = tok_buf_ref.shape
    nsem = min(32, ts)                       # matches host-side scratch shape
    unroll = 8 if ts % 8 == 0 else 1

    slot = c % 2
    base_cur = (b * n_chunks + c) * ts       # flat token-id offset of this chunk
    base_nxt = base_cur + ts                 # ... of the next chunk (same batch row)

    def issue_rows(slot_idx, base):
        # One 1-row HBM->VMEM DMA per token; partially unrolled so the SMEM id
        # read / address calc / DMA-descriptor push co-issue across rows.
        def body(i, carry):
            for u in range(unroll):
                s = i * unroll + u
                tok_id = tok_ids_ref[base + s]
                pltpu.make_async_copy(tok_hbm_ref.at[tok_id],
                                      tok_buf_ref.at[slot_idx, s],
                                      copy_sems.at[slot_idx, s % nsem]).start()
            return carry
        lax.fori_loop(0, ts // unroll, body, 0)

    def wait_rows(slot_idx):
        # Waits mirror the issue loop exactly (same dst ref / semaphore / copy
        # size); the dummy HBM row as src is fine since wait is keyed on
        # dst + semaphore + size, and all row copies are identically shaped.
        def body(i, carry):
            for u in range(unroll):
                s = i * unroll + u
                pltpu.make_async_copy(tok_hbm_ref.at[0],
                                      tok_buf_ref.at[slot_idx, s],
                                      copy_sems.at[slot_idx, s % nsem]).wait()
            return carry
        lax.fori_loop(0, ts // unroll, body, 0)

    # 1) First chunk of a batch row: gather its own rows (nothing prefetched yet).
    @pl.when(c == 0)
    def _():
        issue_rows(slot, base_cur)

    # 2) Cross-step prefetch: start the next chunk's gather into the other slot
    #    while this chunk is still being processed.
    @pl.when(c + 1 < n_chunks)
    def _():
        issue_rows(1 - slot, base_nxt)

    # 3) Segment lookup = two VPU selects against the 3 resident rows plus one
    #    block-wise positional add. Runs while the gather DMAs are in flight.
    #    (Segment ids are assumed in [0, 3) as in the module; no index check.)
    seg = seg_ids_ref[...]                                        # (TS, 1) int32
    tab = seg_tab_ref[...].astype(jnp.float32)                    # (3, D)
    r0, r1, r2 = tab[0:1, :], tab[1:2, :], tab[2:3, :]            # (1, D) each
    seg_emb = jnp.where(seg == 0, r0, jnp.where(seg == 1, r1, r2))  # (TS, D)
    seg_pos = seg_emb + pos_ref[...].astype(jnp.float32)

    # 4) Drain this chunk's gather, add, single lane-dense store.
    wait_rows(slot)
    out_ref[...] = (tok_buf_ref[slot].astype(jnp.float32) + seg_pos).astype(out_ref.dtype)
    # TODO(synk): training-mode dropout(p=0.1) could be fused here via
    # pltpu.prng_seed + pltpu.prng_random_bits; eval mode (identity) is implemented.


def sinusoidal_embedding(hidden_dim: int, max_seq_length: int) -> jnp.ndarray:
    """Matches SinusoidalEmbedding.__init__ (constant table, computed host-side)."""
    freq = jnp.exp(-jnp.log(jnp.float32(10000.0))
                   * jnp.arange(0, hidden_dim, 2, dtype=jnp.float32) / hidden_dim)
    seq_idx = jnp.arange(max_seq_length, dtype=jnp.float32)[:, None]   # (L, 1)
    sin_v = jnp.sin(seq_idx * freq)                                    # (L, D/2)
    cos_v = jnp.cos(seq_idx * freq)                                    # (L, D/2)
    return jnp.concatenate([sin_v, cos_v], axis=-1)                    # (L, D)


def _pick_chunk(seq_len: int, hidden: int, itemsize: int) -> int:
    """Largest sublane-aligned chunk (<=512 rows, (TS,D) tile <= ~2 MiB) dividing S."""
    budget = 2 * 1024 * 1024
    for ts in (512, 256, 128, 64, 32, 16, 8):
        if seq_len % ts == 0 and (ts * hidden * itemsize <= budget or ts == 8):
            return ts
    return seq_len   # small / awkward S -> one full-sequence chunk (full-dim block)


def embeddings_forward(token_ids, segment_ids, tok_table, seg_table, pos_table,
                       *, chunk_rows=None):
    """Pallas-backed Embeddings.forward (eval mode)."""
    B, S = token_ids.shape
    V, D = tok_table.shape
    out_dtype = tok_table.dtype
    itemsize = jnp.dtype(out_dtype).itemsize

    TS = chunk_rows if chunk_rows is not None else _pick_chunk(S, D, itemsize)
    assert S % TS == 0, "chunk_rows must divide the sequence length"
    C = S // TS
    NSEM = min(32, TS)                       # DMA-semaphore ring per buffer slot

    pos_slice = pos_table[:S, :].astype(out_dtype)                # (S, D)
    tok_flat = token_ids.reshape(B * S).astype(jnp.int32)         # 1-D SMEM prefetch
    seg3d = segment_ids.reshape(B, S, 1).astype(jnp.int32)        # per-chunk (TS,1) blocks

    # Scoped VMEM: tok_buf (2x) + double-buffered pos/out tiles + small tables,
    # with headroom; clamped to the v7x physical 64 MiB.
    block_bytes = TS * D * itemsize
    vmem_limit = min(2 * (6 * block_bytes + 2 * 3 * D * itemsize + 2 * TS * 128 * 4)
                     + (4 << 20), 64 << 20)

    cost = pl.CostEstimate(
        flops=6 * B * S * D,                           # selects + adds
        transcendentals=0,
        bytes_accessed=(B * S * D * itemsize           # gathered token rows (HBM read)
                        + B * S * D * itemsize         # output write
                        + (3 + S) * D * itemsize       # segment + positional tables
                        + 2 * B * S * 4))              # ids

    grid_spec = pltpu.PrefetchScalarGridSpec(
        num_scalar_prefetch=1,                                       # token ids -> SMEM
        grid=(B, C),
        in_specs=[
            pl.BlockSpec(memory_space=pl.ANY),                       # token table, HBM
            pl.BlockSpec((pl.Squeezed(), TS, 1),
                         lambda b, c, ids: (b, c, 0)),               # segment-id chunk
            pl.BlockSpec((3, D), lambda b, c, ids: (0, 0)),          # segment table (resident)
            pl.BlockSpec((TS, D), lambda b, c, ids: (c, 0)),         # positional rows (chunk)
        ],
        out_specs=pl.BlockSpec((pl.Squeezed(), TS, D),
                               lambda b, c, ids: (b, c, 0)),
        scratch_shapes=[
            pltpu.VMEM((2, TS, D), out_dtype),       # double-buffered gathered rows
            pltpu.SemaphoreType.DMA((2, NSEM)),      # semaphore ring per slot
        ],
    )

    return pl.pallas_call(
        _embeddings_kernel,
        out_shape=jax.ShapeDtypeStruct((B, S, D), out_dtype),
        grid_spec=grid_spec,
        compiler_params=pltpu.CompilerParams(
            # batch across cores; chunk axis sequential for the cross-step prefetch
            dimension_semantics=("parallel", "arbitrary"),
            vmem_limit_bytes=int(vmem_limit)),
        cost_estimate=cost,
    )(tok_flat, tok_table, seg3d, seg_table, pos_slice)


if __name__ == "__main__":
    # Small, module-consistent shapes; hidden=128 keeps output tiles lane-dense.
    hidden_dim = 128
    vocab_size = 64
    max_seq_length = 32

    key = jax.random.PRNGKey(0)
    k_tok, k_seg, k_ids, k_segids = jax.random.split(key, 4)

    # Deterministic parameter init (nn.Embedding with padding_idx=0 => row 0 is zero).
    tok_table = jax.random.normal(k_tok, (vocab_size, hidden_dim), dtype=jnp.float32)
    tok_table = tok_table.at[0].set(0.0)
    seg_table = jax.random.normal(k_seg, (3, hidden_dim), dtype=jnp.float32)
    seg_table = seg_table.at[0].set(0.0)
    pos_table = sinusoidal_embedding(hidden_dim, max_seq_length)

    def ref_forward(token_ids, segment_ids):
        s = token_ids.shape[1]
        return tok_table[token_ids] + seg_table[segment_ids] + pos_table[None, :s, :]

    # Case 1: single chunk per sequence (tiny shape).
    b1, s1 = 2, 8
    ids1 = jax.random.randint(k_ids, (b1, s1), 0, vocab_size, dtype=jnp.int32)
    seg1 = jax.random.randint(k_segids, (b1, s1), 0, 3, dtype=jnp.int32)
    out1 = jax.block_until_ready(
        embeddings_forward(ids1, seg1, tok_table, seg_table, pos_table))
    ref1 = ref_forward(ids1, seg1)
    assert out1.shape == (b1, s1, hidden_dim)
    assert jnp.allclose(out1, ref1, atol=1e-5, rtol=1e-5), float(jnp.max(jnp.abs(out1 - ref1)))

    # Case 2: several chunks per sequence -> exercises the cross-step
    # double-buffered gather prefetch (chunk_rows=8 => 4 chunks per batch row).
    b2, s2 = 2, 32
    k_ids2, k_seg2 = jax.random.split(k_ids)
    ids2 = jax.random.randint(k_ids2, (b2, s2), 0, vocab_size, dtype=jnp.int32)
    seg2 = jax.random.randint(k_seg2, (b2, s2), 0, 3, dtype=jnp.int32)
    out2 = jax.block_until_ready(
        embeddings_forward(ids2, seg2, tok_table, seg_table, pos_table, chunk_rows=8))
    ref2 = ref_forward(ids2, seg2)
    assert out2.shape == (b2, s2, hidden_dim)
    assert jnp.allclose(out2, ref2, atol=1e-5, rtol=1e-5), float(jnp.max(jnp.abs(out2 - ref2)))

    print("KERNEL_OK")
</pallas_src>

<mosaic_0001>
module attributes {stable_mosaic.version = 11 : i64} {
  func.func @_embeddings_kernel(%arg0: i32, %arg1: i32, %arg2: memref<16xi32, #tpu.memory_space<smem>>, %arg3: memref<64x128xf32, #tpu.memory_space<any>>, %arg4: memref<1x8x1xi32, #tpu.memory_space<vmem>>, %arg5: memref<3x128xf32, #tpu.memory_space<vmem>>, %arg6: memref<8x128xf32, #tpu.memory_space<vmem>>, %arg7: memref<1x8x128xf32, #tpu.memory_space<vmem>>, %arg8: memref<2x8x128xf32, #tpu.memory_space<vmem>>, %arg9: memref<2x8x!tpu.dma_semaphore, #tpu.memory_space<semaphore_mem>>) attributes {dimension_semantics = [#tpu.dimension_semantics<parallel>, #tpu.dimension_semantics<arbitrary>], iteration_bounds = array<i64: 2, 1>, scalar_prefetch = 1 : i64, scratch_operands = 2 : i64, tpu.core_type = #tpu.core_type<tc>, window_params = [{}, {transform_indices = @transform_1, window_bounds = array<i64: 1, 8, 1>}, {pipeline_mode = #tpu.pipeline_mode<synchronous>, transform_indices = @transform_2, window_bounds = array<i64: 3, 128>}, {transform_indices = @transform_3, window_bounds = array<i64: 8, 128>}, {transform_indices = @transform_4, window_bounds = array<i64: 1, 8, 128>}]} {
    %c2_i32 = arith.constant 2 : i32
    %c0_i32 = arith.constant 0 : i32
    %0 = arith.cmpi eq, %c2_i32, %c0_i32 : i32
    %c1_i32 = arith.constant 1 : i32
    %1 = arith.select %0, %c1_i32, %c2_i32 : i32
    %2 = arith.remsi %arg1, %1 : i32
    %c0_i32_0 = arith.constant 0 : i32
    %3 = arith.cmpi ne, %2, %c0_i32_0 : i32
    %c0_i32_1 = arith.constant 0 : i32
    %4 = arith.cmpi slt, %2, %c0_i32_1 : i32
    %c0_i32_2 = arith.constant 0 : i32
    %5 = arith.cmpi slt, %1, %c0_i32_2 : i32
    %6 = arith.xori %4, %5 : i1
    %7 = arith.andi %6, %3 : i1
    %8 = arith.addi %2, %1 : i32
    %9 = arith.select %7, %8, %2 : i32
    %c1_i32_3 = arith.constant 1 : i32
    %10 = arith.muli %arg0, %c1_i32_3 : i32
    %11 = arith.addi %10, %arg1 : i32
    %c8_i32 = arith.constant 8 : i32
    %12 = arith.muli %11, %c8_i32 : i32
    %c8_i32_4 = arith.constant 8 : i32
    %13 = arith.addi %12, %c8_i32_4 : i32
    %c0_i32_5 = arith.constant 0 : i32
    %14 = arith.cmpi eq, %arg1, %c0_i32_5 : i32
    %15 = arith.extui %14 : i1 to i32
    %c0_i32_6 = arith.constant 0 : i32
    %16 = arith.cmpi ne, %15, %c0_i32_6 : i32
    scf.if %16 {
      %c0_i32_108 = arith.constant 0 : i32
      %c8_i32_109 = arith.constant 8 : i32
      %196 = arith.muli %c0_i32_108, %c8_i32_109 : i32
      %c0_i32_110 = arith.constant 0 : i32
      %197 = arith.addi %196, %c0_i32_110 : i32
      %198 = arith.addi %12, %197 : i32
      %199 = arith.index_cast %198 : i32 to index
      %200 = memref.load %arg2[%199] : memref<16xi32, #tpu.memory_space<smem>>
      %c8_i32_111 = arith.constant 8 : i32
      %c0_i32_112 = arith.constant 0 : i32
      %201 = arith.cmpi eq, %c8_i32_111, %c0_i32_112 : i32
      %c1_i32_113 = arith.constant 1 : i32
      %202 = arith.select %201, %c1_i32_113, %c8_i32_111 : i32
      %203 = arith.remsi %197, %202 : i32
      %c0_i32_114 = arith.constant 0 : i32
      %204 = arith.cmpi ne, %203, %c0_i32_114 : i32
      %c0_i32_115 = arith.constant 0 : i32
      %205 = arith.cmpi slt, %203, %c0_i32_115 : i32
      %c0_i32_116 = arith.constant 0 : i32
      %206 = arith.cmpi slt, %202, %c0_i32_116 : i32
      %207 = arith.xori %205, %206 : i1
      %208 = arith.andi %207, %204 : i1
      %209 = arith.addi %203, %202 : i32
      %210 = arith.select %208, %209, %203 : i32
      %c0_i32_117 = arith.constant 0 : i32
      %211 = tpu.memref_slice %arg3[%200, %c0_i32_117] : memref<64x128xf32, #tpu.memory_space<any>> -> memref<1x128xf32, #tpu.memory_space<any>>
      %212 = tpu.memref_squeeze %211 : memref<1x128xf32, #tpu.memory_space<any>> -> memref<128xf32, #tpu.memory_space<any>>
      %c0_i32_118 = arith.constant 0 : i32
      %213 = tpu.memref_slice %arg8[%9, %197, %c0_i32_118] : memref<2x8x128xf32, #tpu.memory_space<vmem>> -> memref<1x1x128xf32, #tpu.memory_space<vmem>>
      %214 = tpu.memref_squeeze %213 : memref<1x1x128xf32, #tpu.memory_space<vmem>> -> memref<128xf32, #tpu.memory_space<vmem>>
      %215 = tpu.memref_slice %arg9[%9, %210] : memref<2x8x!tpu.dma_semaphore, #tpu.memory_space<semaphore_mem>> -> memref<1x1x!tpu.dma_semaphore, #tpu.memory_space<semaphore_mem>>
      %216 = tpu.memref_squeeze %215 : memref<1x1x!tpu.dma_semaphore, #tpu.memory_space<semaphore_mem>> -> memref<!tpu.dma_semaphore, #tpu.memory_space<semaphore_mem>>
      tpu.enqueue_dma source(%212 : memref<128xf32, #tpu.memory_space<any>>) target(%214 : memref<128xf32, #tpu.memory_space<vmem>>) target_semaphore(%216 : memref<!tpu.dma_semaphore, #tpu.memory_space<semaphore_mem>>)
      %c8_i32_119 = arith.constant 8 : i32
      %217 = arith.muli %c0_i32_108, %c8_i32_119 : i32
      %c1_i32_120 = arith.constant 1 : i32
      %218 = arith.addi %217, %c1_i32_120 : i32
      %219 = arith.addi %12, %218 : i32
      %220 = arith.index_cast %219 : i32 to index
      %221 = memref.load %arg2[%220] : memref<16xi32, #tpu.memory_space<smem>>
      %c8_i32_121 = arith.constant 8 : i32
      %c0_i32_122 = arith.constant 0 : i32
      %222 = arith.cmpi eq, %c8_i32_121, %c0_i32_122 : i32
      %c1_i32_123 = arith.constant 1 : i32
      %223 = arith.select %222, %c1_i32_123, %c8_i32_121 : i32
      %224 = arith.remsi %218, %223 : i32
      %c0_i32_124 = arith.constant 0 : i32
      %225 = arith.cmpi ne, %224, %c0_i32_124 : i32
      %c0_i32_125 = arith.constant 0 : i32
      %226 = arith.cmpi slt, %224, %c0_i32_125 : i32
      %c0_i32_126 = arith.constant 0 : i32
      %227 = arith.cmpi slt, %223, %c0_i32_126 : i32
      %228 = arith.xori %226, %227 : i1
      %229 = arith.andi %228, %225 : i1
      %230 = arith.addi %224, %223 : i32
      %231 = arith.select %229, %230, %224 : i32
      %c0_i32_127 = arith.constant 0 : i32
      %232 = tpu.memref_slice %arg3[%221, %c0_i32_127] : memref<64x128xf32, #tpu.memory_space<any>> -> memref<1x128xf32, #tpu.memory_space<any>>
      %233 = tpu.memref_squeeze %232 : memref<1x128xf32, #tpu.memory_space<any>> -> memref<128xf32, #tpu.memory_space<any>>
      %c0_i32_128 = arith.constant 0 : i32
      %234 = tpu.memref_slice %arg8[%9, %218, %c0_i32_128] : memref<2x8x128xf32, #tpu.memory_space<vmem>> -> memref<1x1x128xf32, #tpu.memory_space<vmem>>
      %235 = tpu.memref_squeeze %234 : memref<1x1x128xf32, #tpu.memory_space<vmem>> -> memref<128xf32, #tpu.memory_space<vmem>>
      %236 = tpu.memref_slice %arg9[%9, %231] : memref<2x8x!tpu.dma_semaphore, #tpu.memory_space<semaphore_mem>> -> memref<1x1x!tpu.dma_semaphore, #tpu.memory_space<semaphore_mem>>
      %237 = tpu.memref_squeeze %236 : memref<1x1x!tpu.dma_semaphore, #tpu.memory_space<semaphore_mem>> -> memref<!tpu.dma_semaphore, #tpu.memory_space<semaphore_mem>>
      tpu.enqueue_dma source(%233 : memref<128xf32, #tpu.memory_space<any>>) target(%235 : memref<128xf32, #tpu.memory_space<vmem>>) target_semaphore(%237 : memref<!tpu.dma_semaphore, #tpu.memory_space<semaphore_mem>>)
      %c8_i32_129 = arith.constant 8 : i32
      %238 = arith.muli %c0_i32_108, %c8_i32_129 : i32
      %c2_i32_130 = arith.constant 2 : i32
      %239 = arith.addi %238, %c2_i32_130 : i32
      %240 = arith.addi %12, %239 : i32
      %241 = arith.index_cast %240 : i32 to index
      %242 = memref.load %arg2[%241] : memref<16xi32, #tpu.memory_space<smem>>
      %c8_i32_131 = arith.constant 8 : i32
      %c0_i32_132 = arith.constant 0 : i32
      %243 = arith.cmpi eq, %c8_i32_131, %c0_i32_132 : i32
      %c1_i32_133 = arith.constant 1 : i32
      %244 = arith.select %243, %c1_i32_133, %c8_i32_131 : i32
      %245 = arith.remsi %239, %244 : i32
      %c0_i32_134 = arith.constant 0 : i32
      %246 = arith.cmpi ne, %245, %c0_i32_134 : i32
      %c0_i32_135 = arith.constant 0 : i32
      %247 = arith.cmpi slt, %245, %c0_i32_135 : i32
      %c0_i32_136 = arith.constant 0 : i32
      %248 = arith.cmpi slt, %244, %c0_i32_136 : i32
      %249 = arith.xori %247, %248 : i1
      %250 = arith.andi %249, %246 : i1
      %251 = arith.addi %245, %244 : i32
      %252 = arith.select %250, %251, %245 : i32
      %c0_i32_137 = arith.constant 0 : i32
      %253 = tpu.memref_slice %arg3[%242, %c0_i32_137] : memref<64x128xf32, #tpu.memory_space<any>> -> memref<1x128xf32, #tpu.memory_space<any>>
      %254 = tpu.memref_squeeze %253 : memref<1x128xf32, #tpu.memory_space<any>> -> memref<128xf32, #tpu.memory_space<any>>
      %c0_i32_138 = arith.constant 0 : i32
      %255 = tpu.memref_slice %arg8[%9, %239, %c0_i32_138] : memref<2x8x128xf32, #tpu.memory_space<vmem>> -> memref<1x1x128xf32, #tpu.memory_space<vmem>>
      %256 = tpu.memref_squeeze %255 : memref<1x1x128xf32, #tpu.memory_space<vmem>> -> memref<128xf32, #tpu.memory_space<vmem>>
      %257 = tpu.memref_slice %arg9[%9, %252] : memref<2x8x!tpu.dma_semaphore, #tpu.memory_space<semaphore_mem>> -> memref<1x1x!tpu.dma_semaphore, #tpu.memory_space<semaphore_mem>>
      %258 = tpu.memref_squeeze %257 : memref<1x1x!tpu.dma_semaphore, #tpu.memory_space<semaphore_mem>> -> memref<!tpu.dma_semaphore, #tpu.memory_space<semaphore_mem>>
      tpu.enqueue_dma source(%254 : memref<128xf32, #tpu.memory_space<any>>) target(%256 : memref<128xf32, #tpu.memory_space<vmem>>) target_semaphore(%258 : memref<!tpu.dma_semaphore, #tpu.memory_space<semaphore_mem>>)
      %c8_i32_139 = arith.constant 8 : i32
      %259 = arith.muli %c0_i32_108, %c8_i32_139 : i32
      %c3_i32_140 = arith.constant 3 : i32
      %260 = arith.addi %259, %c3_i32_140 : i32
      %261 = arith.addi %12, %260 : i32
      %262 = arith.index_cast %261 : i32 to index
      %263 = memref.load %arg2[%262] : memref<16xi32, #tpu.memory_space<smem>>
      %c8_i32_141 = arith.constant 8 : i32
      %c0_i32_142 = arith.constant 0 : i32
      %264 = arith.cmpi eq, %c8_i32_141, %c0_i32_142 : i32
      %c1_i32_143 = arith.constant 1 : i32
      %265 = arith.select %264, %c1_i32_143, %c8_i32_141 : i32
      %266 = arith.remsi %260, %265 : i32
      %c0_i32_144 = arith.constant 0 : i32
      %267 = arith.cmpi ne, %266, %c0_i32_144 : i32
      %c0_i32_145 = arith.constant 0 : i32
      %268 = arith.cmpi slt, %266, %c0_i32_145 : i32
      %c0_i32_146 = arith.constant 0 : i32
      %269 = arith.cmpi slt, %265, %c0_i32_146 : i32
      %270 = arith.xori %268, %269 : i1
      %271 = arith.andi %270, %267 : i1
      %272 = arith.addi %266, %265 : i32
      %273 = arith.select %271, %272, %266 : i32
      %c0_i32_147 = arith.constant 0 : i32
      %274 = tpu.memref_slice %arg3[%263, %c0_i32_147] : memref<64x128xf32, #tpu.memory_space<any>> -> memref<1x128xf32, #tpu.memory_space<any>>
      %275 = tpu.memref_squeeze %274 : memref<1x128xf32, #tpu.memory_space<any>> -> memref<128xf32, #tpu.memory_space<any>>
      %c0_i32_148 = arith.constant 0 : i32
      %276 = tpu.memref_slice %arg8[%9, %260, %c0_i32_148] : memref<2x8x128xf32, #tpu.memory_space<vmem>> -> memref<1x1x128xf32, #tpu.memory_space<vmem>>
      %277 = tpu.memref_squeeze %276 : memref<1x1x128xf32, #tpu.memory_space<vmem>> -> memref<128xf32, #tpu.memory_space<vmem>>
      %278 = tpu.memref_slice %arg9[%9, %273] : memref<2x8x!tpu.dma_semaphore, #tpu.memory_space<semaphore_mem>> -> memref<1x1x!tpu.dma_semaphore, #tpu.memory_space<semaphore_mem>>
      %279 = tpu.memref_squeeze %278 : memref<1x1x!tpu.dma_semaphore, #tpu.memory_space<semaphore_mem>> -> memref<!tpu.dma_semaphore, #tpu.memory_space<semaphore_mem>>
      tpu.enqueue_dma source(%275 : memref<128xf32, #tpu.memory_space<any>>) target(%277 : memref<128xf32, #tpu.memory_space<vmem>>) target_semaphore(%279 : memref<!tpu.dma_semaphore, #tpu.memory_space<semaphore_mem>>)
      %c8_i32_149 = arith.constant 8 : i32
      %280 = arith.muli %c0_i32_108, %c8_i32_149 : i32
      %c4_i32_150 = arith.constant 4 : i32
      %281 = arith.addi %280, %c4_i32_150 : i32
      %282 = arith.addi %12, %281 : i32
      %283 = arith.index_cast %282 : i32 to index
      %284 = memref.load %arg2[%283] : memref<16xi32, #tpu.memory_space<smem>>
      %c8_i32_151 = arith.constant 8 : i32
      %c0_i32_152 = arith.constant 0 : i32
      %285 = arith.cmpi eq, %c8_i32_151, %c0_i32_152 : i32
      %c1_i32_153 = arith.constant 1 : i32
      %286 = arith.select %285, %c1_i32_153, %c8_i32_151 : i32
      %287 = arith.remsi %281, %286 : i32
      %c0_i32_154 = arith.constant 0 : i32
      %288 = arith.cmpi ne, %287, %c0_i32_154 : i32
      %c0_i32_155 = arith.constant 0 : i32
      %289 = arith.cmpi slt, %287, %c0_i32_155 : i32
      %c0_i32_156 = arith.constant 0 : i32
      %290 = arith.cmpi slt, %286, %c0_i32_156 : i32
      %291 = arith.xori %289, %290 : i1
      %292 = arith.andi %291, %288 : i1
      %293 = arith.addi %287, %286 : i32
      %294 = arith.select %292, %293, %287 : i32
      %c0_i32_157 = arith.constant 0 : i32
      %295 = tpu.memref_slice %arg3[%284, %c0_i32_157] : memref<64x128xf32, #tpu.memory_space<any>> -> memref<1x128xf32, #tpu.memory_space<any>>
      %296 = tpu.memref_squeeze %295 : memref<1x128xf32, #tpu.memory_space<any>> -> memref<128xf32, #tpu.memory_space<any>>
      %c0_i32_158 = arith.constant 0 : i32
      %297 = tpu.memref_slice %arg8[%9, %281, %c0_i32_158] : memref<2x8x128xf32, #tpu.memory_space<vmem>> -> memref<1x1x128xf32, #tpu.memory_space<vmem>>
      %298 = tpu.memref_squeeze %297 : memref<1x1x128xf32, #tpu.memory_space<vmem>> -> memref<128xf32, #tpu.memory_space<vmem>>
      %299 = tpu.memref_slice %arg9[%9, %294] : memref<2x8x!tpu.dma_semaphore, #tpu.memory_space<semaphore_mem>> -> memref<1x1x!tpu.dma_semaphore, #tpu.memory_space<semaphore_mem>>
      %300 = tpu.memref_squeeze %299 : memref<1x1x!tpu.dma_semaphore, #tpu.memory_space<semaphore_mem>> -> memref<!tpu.dma_semaphore, #tpu.memory_space<semaphore_mem>>
      tpu.enqueue_dma source(%296 : memref<128xf32, #tpu.memory_space<any>>) target(%298 : memref<128xf32, #tpu.memory_space<vmem>>) target_semaphore(%300 : memref<!tpu.dma_semaphore, #tpu.memory_space<semaphore_mem>>)
      %c8_i32_159 = arith.constant 8 : i32
      %301 = arith.muli %c0_i32_108, %c8_i32_159 : i32
      %c5_i32_160 = arith.constant 5 : i32
      %302 = arith.addi %301, %c5_i32_160 : i32
      %303 = arith.addi %12, %302 : i32
      %304 = arith.index_cast %303 : i32 to index
      %305 = memref.load %arg2[%304] : memref<16xi32, #tpu.memory_space<smem>>
      %c8_i32_161 = arith.constant 8 : i32
      %c0_i32_162 = arith.constant 0 : i32
      %306 = arith.cmpi eq, %c8_i32_161, %c0_i32_162 : i32
      %c1_i32_163 = arith.constant 1 : i32
      %307 = arith.select %306, %c1_i32_163, %c8_i32_161 : i32
      %308 = arith.remsi %302, %307 : i32
      %c0_i32_164 = arith.constant 0 : i32
      %309 = arith.cmpi ne, %308, %c0_i32_164 : i32
      %c0_i32_165 = arith.constant 0 : i32
      %310 = arith.cmpi slt, %308, %c0_i32_165 : i32
      %c0_i32_166 = arith.constant 0 : i32
      %311 = arith.cmpi slt, %307, %c0_i32_166 : i32
      %312 = arith.xori %310, %311 : i1
      %313 = arith.andi %312, %309 : i1
      %314 = arith.addi %308, %307 : i32
      %315 = arith.select %313, %314, %308 : i32
      %c0_i32_167 = arith.constant 0 : i32
      %316 = tpu.memref_slice %arg3[%305, %c0_i32_167] : memref<64x128xf32, #tpu.memory_space<any>> -> memref<1x128xf32, #tpu.memory_space<any>>
      %317 = tpu.memref_squeeze %316 : memref<1x128xf32, #tpu.memory_space<any>> -> memref<128xf32, #tpu.memory_space<any>>
      %c0_i32_168 = arith.constant 0 : i32
      %318 = tpu.memref_slice %arg8[%9, %302, %c0_i32_168] : memref<2x8x128xf32, #tpu.memory_space<vmem>> -> memref<1x1x128xf32, #tpu.memory_space<vmem>>
      %319 = tpu.memref_squeeze %318 : memref<1x1x128xf32, #tpu.memory_space<vmem>> -> memref<128xf32, #tpu.memory_space<vmem>>
      %320 = tpu.memref_slice %arg9[%9, %315] : memref<2x8x!tpu.dma_semaphore, #tpu.memory_space<semaphore_mem>> -> memref<1x1x!tpu.dma_semaphore, #tpu.memory_space<semaphore_mem>>
      %321 = tpu.memref_squeeze %320 : memref<1x1x!tpu.dma_semaphore, #tpu.memory_space<semaphore_mem>> -> memref<!tpu.dma_semaphore, #tpu.memory_space<semaphore_mem>>
      tpu.enqueue_dma source(%317 : memref<128xf32, #tpu.memory_space<any>>) target(%319 : memref<128xf32, #tpu.memory_space<vmem>>) target_semaphore(%321 : memref<!tpu.dma_semaphore, #tpu.memory_space<semaphore_mem>>)
      %c8_i32_169 = arith.constant 8 : i32
      %322 = arith.muli %c0_i32_108, %c8_i32_169 : i32
      %c6_i32_170 = arith.constant 6 : i32
      %323 = arith.addi %322, %c6_i32_170 : i32
      %324 = arith.addi %12, %323 : i32
      %325 = arith.index_cast %324 : i32 to index
      %326 = memref.load %arg2[%325] : memref<16xi32, #tpu.memory_space<smem>>
      %c8_i32_171 = arith.constant 8 : i32
      %c0_i32_172 = arith.constant 0 : i32
      %327 = arith.cmpi eq, %c8_i32_171, %c0_i32_172 : i32
      %c1_i32_173 = arith.constant 1 : i32
      %328 = arith.select %327, %c1_i32_173, %c8_i32_171 : i32
      %329 = arith.remsi %323, %328 : i32
      %c0_i32_174 = arith.constant 0 : i32
      %330 = arith.cmpi ne, %329, %c0_i32_174 : i32
      %c0_i32_175 = arith.constant 0 : i32
      %331 = arith.cmpi slt, %329, %c0_i32_175 : i32
      %c0_i32_176 = arith.constant 0 : i32
      %332 = arith.cmpi slt, %328, %c0_i32_176 : i32
      %333 = arith.xori %331, %332 : i1
      %334 = arith.andi %333, %330 : i1
      %335 = arith.addi %329, %328 : i32
      %336 = arith.select %334, %335, %329 : i32
      %c0_i32_177 = arith.constant 0 : i32
      %337 = tpu.memref_slice %arg3[%326, %c0_i32_177] : memref<64x128xf32, #tpu.memory_space<any>> -> memref<1x128xf32, #tpu.memory_space<any>>
      %338 = tpu.memref_squeeze %337 : memref<1x128xf32, #tpu.memory_space<any>> -> memref<128xf32, #tpu.memory_space<any>>
      %c0_i32_178 = arith.constant 0 : i32
      %339 = tpu.memref_slice %arg8[%9, %323, %c0_i32_178] : memref<2x8x128xf32, #tpu.memory_space<vmem>> -> memref<1x1x128xf32, #tpu.memory_space<vmem>>
      %340 = tpu.memref_squeeze %339 : memref<1x1x128xf32, #tpu.memory_space<vmem>> -> memref<128xf32, #tpu.memory_space<vmem>>
      %341 = tpu.memref_slice %arg9[%9, %336] : memref<2x8x!tpu.dma_semaphore, #tpu.memory_space<semaphore_mem>> -> memref<1x1x!tpu.dma_semaphore, #tpu.memory_space<semaphore_mem>>
      %342 = tpu.memref_squeeze %341 : memref<1x1x!tpu.dma_semaphore, #tpu.memory_space<semaphore_mem>> -> memref<!tpu.dma_semaphore, #tpu.memory_space<semaphore_mem>>
      tpu.enqueue_dma source(%338 : memref<128xf32, #tpu.memory_space<any>>) target(%340 : memref<128xf32, #tpu.memory_space<vmem>>) target_semaphore(%342 : memref<!tpu.dma_semaphore, #tpu.memory_space<semaphore_mem>>)
      %c8_i32_179 = arith.constant 8 : i32
      %343 = arith.muli %c0_i32_108, %c8_i32_179 : i32
      %c7_i32_180 = arith.constant 7 : i32
      %344 = arith.addi %343, %c7_i32_180 : i32
      %345 = arith.addi %12, %344 : i32
      %346 = arith.index_cast %345 : i32 to index
      %347 = memref.load %arg2[%346] : memref<16xi32, #tpu.memory_space<smem>>
      %c8_i32_181 = arith.constant 8 : i32
      %c0_i32_182 = arith.constant 0 : i32
      %348 = arith.cmpi eq, %c8_i32_181, %c0_i32_182 : i32
      %c1_i32_183 = arith.constant 1 : i32
      %349 = arith.select %348, %c1_i32_183, %c8_i32_181 : i32
      %350 = arith.remsi %344, %349 : i32
      %c0_i32_184 = arith.constant 0 : i32
      %351 = arith.cmpi ne, %350, %c0_i32_184 : i32
      %c0_i32_185 = arith.constant 0 : i32
      %352 = arith.cmpi slt, %350, %c0_i32_185 : i32
      %c0_i32_186 = arith.constant 0 : i32
      %353 = arith.cmpi slt, %349, %c0_i32_186 : i32
      %354 = arith.xori %352, %353 : i1
      %355 = arith.andi %354, %351 : i1
      %356 = arith.addi %350, %349 : i32
      %357 = arith.select %355, %356, %350 : i32
      %c0_i32_187 = arith.constant 0 : i32
      %358 = tpu.memref_slice %arg3[%347, %c0_i32_187] : memref<64x128xf32, #tpu.memory_space<any>> -> memref<1x128xf32, #tpu.memory_space<any>>
      %359 = tpu.memref_squeeze %358 : memref<1x128xf32, #tpu.memory_space<any>> -> memref<128xf32, #tpu.memory_space<any>>
      %c0_i32_188 = arith.constant 0 : i32
      %360 = tpu.memref_slice %arg8[%9, %344, %c0_i32_188] : memref<2x8x128xf32, #tpu.memory_space<vmem>> -> memref<1x1x128xf32, #tpu.memory_space<vmem>>
      %361 = tpu.memref_squeeze %360 : memref<1x1x128xf32, #tpu.memory_space<vmem>> -> memref<128xf32, #tpu.memory_space<vmem>>
      %362 = tpu.memref_slice %arg9[%9, %357] : memref<2x8x!tpu.dma_semaphore, #tpu.memory_space<semaphore_mem>> -> memref<1x1x!tpu.dma_semaphore, #tpu.memory_space<semaphore_mem>>
      %363 = tpu.memref_squeeze %362 : memref<1x1x!tpu.dma_semaphore, #tpu.memory_space<semaphore_mem>> -> memref<!tpu.dma_semaphore, #tpu.memory_space<semaphore_mem>>
      tpu.enqueue_dma source(%359 : memref<128xf32, #tpu.memory_space<any>>) target(%361 : memref<128xf32, #tpu.memory_space<vmem>>) target_semaphore(%363 : memref<!tpu.dma_semaphore, #tpu.memory_space<semaphore_mem>>)
      %c1_i32_189 = arith.constant 1 : i32
    } else {
    }
    %c1_i32_7 = arith.constant 1 : i32
    %17 = arith.addi %arg1, %c1_i32_7 : i32
    %c1_i32_8 = arith.constant 1 : i32
    %18 = arith.cmpi slt, %17, %c1_i32_8 : i32
    %19 = arith.extui %18 : i1 to i32
    %c0_i32_9 = arith.constant 0 : i32
    %20 = arith.cmpi ne, %19, %c0_i32_9 : i32
    scf.if %20 {
      %c1_i32_108 = arith.constant 1 : i32
      %196 = arith.subi %c1_i32_108, %9 : i32
      %c0_i32_109 = arith.constant 0 : i32
      %c8_i32_110 = arith.constant 8 : i32
      %197 = arith.muli %c0_i32_109, %c8_i32_110 : i32
      %c0_i32_111 = arith.constant 0 : i32
      %198 = arith.addi %197, %c0_i32_111 : i32
      %199 = arith.addi %13, %198 : i32
      %200 = arith.index_cast %199 : i32 to index
      %201 = memref.load %arg2[%200] : memref<16xi32, #tpu.memory_space<smem>>
      %c8_i32_112 = arith.constant 8 : i32
      %c0_i32_113 = arith.constant 0 : i32
      %202 = arith.cmpi eq, %c8_i32_112, %c0_i32_113 : i32
      %c1_i32_114 = arith.constant 1 : i32
      %203 = arith.select %202, %c1_i32_114, %c8_i32_112 : i32
      %204 = arith.remsi %198, %203 : i32
      %c0_i32_115 = arith.constant 0 : i32
      %205 = arith.cmpi ne, %204, %c0_i32_115 : i32
      %c0_i32_116 = arith.constant 0 : i32
      %206 = arith.cmpi slt, %204, %c0_i32_116 : i32
      %c0_i32_117 = arith.constant 0 : i32
      %207 = arith.cmpi slt, %203, %c0_i32_117 : i32
      %208 = arith.xori %206, %207 : i1
      %209 = arith.andi %208, %205 : i1
      %210 = arith.addi %204, %203 : i32
      %211 = arith.select %209, %210, %204 : i32
      %c0_i32_118 = arith.constant 0 : i32
      %212 = tpu.memref_slice %arg3[%201, %c0_i32_118] : memref<64x128xf32, #tpu.memory_space<any>> -> memref<1x128xf32, #tpu.memory_space<any>>
      %213 = tpu.memref_squeeze %212 : memref<1x128xf32, #tpu.memory_space<any>> -> memref<128xf32, #tpu.memory_space<any>>
      %c0_i32_119 = arith.constant 0 : i32
      %214 = tpu.memref_slice %arg8[%196, %198, %c0_i32_119] : memref<2x8x128xf32, #tpu.memory_space<vmem>> -> memref<1x1x128xf32, #tpu.memory_space<vmem>>
      %215 = tpu.memref_squeeze %214 : memref<1x1x128xf32, #tpu.memory_space<vmem>> -> memref<128xf32, #tpu.memory_space<vmem>>
      %216 = tpu.memref_slice %arg9[%196, %211] : memref<2x8x!tpu.dma_semaphore, #tpu.memory_space<semaphore_mem>> -> memref<1x1x!tpu.dma_semaphore, #tpu.memory_space<semaphore_mem>>
      %217 = tpu.memref_squeeze %216 : memref<1x1x!tpu.dma_semaphore, #tpu.memory_space<semaphore_mem>> -> memref<!tpu.dma_semaphore, #tpu.memory_space<semaphore_mem>>
      tpu.enqueue_dma source(%213 : memref<128xf32, #tpu.memory_space<any>>) target(%215 : memref<128xf32, #tpu.memory_space<vmem>>) target_semaphore(%217 : memref<!tpu.dma_semaphore, #tpu.memory_space<semaphore_mem>>)
      %c8_i32_120 = arith.constant 8 : i32
      %218 = arith.muli %c0_i32_109, %c8_i32_120 : i32
      %c1_i32_121 = arith.constant 1 : i32
      %219 = arith.addi %218, %c1_i32_121 : i32
      %220 = arith.addi %13, %219 : i32
      %221 = arith.index_cast %220 : i32 to index
      %222 = memref.load %arg2[%221] : memref<16xi32, #tpu.memory_space<smem>>
      %c8_i32_122 = arith.constant 8 : i32
      %c0_i32_123 = arith.constant 0 : i32
      %223 = arith.cmpi eq, %c8_i32_122, %c0_i32_123 : i32
      %c1_i32_124 = arith.constant 1 : i32
      %224 = arith.select %223, %c1_i32_124, %c8_i32_122 : i32
      %225 = arith.remsi %219, %224 : i32
      %c0_i32_125 = arith.constant 0 : i32
      %226 = arith.cmpi ne, %225, %c0_i32_125 : i32
      %c0_i32_126 = arith.constant 0 : i32
      %227 = arith.cmpi slt, %225, %c0_i32_126 : i32
      %c0_i32_127 = arith.constant 0 : i32
      %228 = arith.cmpi slt, %224, %c0_i32_127 : i32
      %229 = arith.xori %227, %228 : i1
      %230 = arith.andi %229, %226 : i1
      %231 = arith.addi %225, %224 : i32
      %232 = arith.select %230, %231, %225 : i32
      %c0_i32_128 = arith.constant 0 : i32
      %233 = tpu.memref_slice %arg3[%222, %c0_i32_128] : memref<64x128xf32, #tpu.memory_space<any>> -> memref<1x128xf32, #tpu.memory_space<any>>
      %234 = tpu.memref_squeeze %233 : memref<1x128xf32, #tpu.memory_space<any>> -> memref<128xf32, #tpu.memory_space<any>>
      %c0_i32_129 = arith.constant 0 : i32
      %235 = tpu.memref_slice %arg8[%196, %219, %c0_i32_129] : memref<2x8x128xf32, #tpu.memory_space<vmem>> -> memref<1x1x128xf32, #tpu.memory_space<vmem>>
      %236 = tpu.memref_squeeze %235 : memref<1x1x128xf32, #tpu.memory_space<vmem>> -> memref<128xf32, #tpu.memory_space<vmem>>
      %237 = tpu.memref_slice %arg9[%196, %232] : memref<2x8x!tpu.dma_semaphore, #tpu.memory_space<semaphore_mem>> -> memref<1x1x!tpu.dma_semaphore, #tpu.memory_space<semaphore_mem>>
      %238 = tpu.memref_squeeze %237 : memref<1x1x!tpu.dma_semaphore, #tpu.memory_space<semaphore_mem>> -> memref<!tpu.dma_semaphore, #tpu.memory_space<semaphore_mem>>
      tpu.enqueue_dma source(%234 : memref<128xf32, #tpu.memory_space<any>>) target(%236 : memref<128xf32, #tpu.memory_space<vmem>>) target_semaphore(%238 : memref<!tpu.dma_semaphore, #tpu.memory_space<semaphore_mem>>)
      %c8_i32_130 = arith.constant 8 : i32
      %239 = arith.muli %c0_i32_109, %c8_i32_130 : i32
      %c2_i32_131 = arith.constant 2 : i32
      %240 = arith.addi %239, %c2_i32_131 : i32
      %241 = arith.addi %13, %240 : i32
      %242 = arith.index_cast %241 : i32 to index
      %243 = memref.load %arg2[%242] : memref<16xi32, #tpu.memory_space<smem>>
      %c8_i32_132 = arith.constant 8 : i32
      %c0_i32_133 = arith.constant 0 : i32
      %244 = arith.cmpi eq, %c8_i32_132, %c0_i32_133 : i32
      %c1_i32_134 = arith.constant 1 : i32
      %245 = arith.select %244, %c1_i32_134, %c8_i32_132 : i32
      %246 = arith.remsi %240, %245 : i32
      %c0_i32_135 = arith.constant 0 : i32
      %247 = arith.cmpi ne, %246, %c0_i32_135 : i32
      %c0_i32_136 = arith.constant 0 : i32
      %248 = arith.cmpi slt, %246, %c0_i32_136 : i32
      %c0_i32_137 = arith.constant 0 : i32
      %249 = arith.cmpi slt, %245, %c0_i32_137 : i32
      %250 = arith.xori %248, %249 : i1
      %251 = arith.andi %250, %247 : i1
      %252 = arith.addi %246, %245 : i32
      %253 = arith.select %251, %252, %246 : i32
      %c0_i32_138 = arith.constant 0 : i32
      %254 = tpu.memref_slice %arg3[%243, %c0_i32_138] : memref<64x128xf32, #tpu.memory_space<any>> -> memref<1x128xf32, #tpu.memory_space<any>>
      %255 = tpu.memref_squeeze %254 : memref<1x128xf32, #tpu.memory_space<any>> -> memref<128xf32, #tpu.memory_space<any>>
      %c0_i32_139 = arith.constant 0 : i32
      %256 = tpu.memref_slice %arg8[%196, %240, %c0_i32_139] : memref<2x8x128xf32, #tpu.memory_space<vmem>> -> memref<1x1x128xf32, #tpu.memory_space<vmem>>
      %257 = tpu.memref_squeeze %256 : memref<1x1x128xf32, #tpu.memory_space<vmem>> -> memref<128xf32, #tpu.memory_space<vmem>>
      %258 = tpu.memref_slice %arg9[%196, %253] : memref<2x8x!tpu.dma_semaphore, #tpu.memory_space<semaphore_mem>> -> memref<1x1x!tpu.dma_semaphore, #tpu.memory_space<semaphore_mem>>
      %259 = tpu.memref_squeeze %258 : memref<1x1x!tpu.dma_semaphore, #tpu.memory_space<semaphore_mem>> -> memref<!tpu.dma_semaphore, #tpu.memory_space<semaphore_mem>>
      tpu.enqueue_dma source(%255 : memref<128xf32, #tpu.memory_space<any>>) target(%257 : memref<128xf32, #tpu.memory_space<vmem>>) target_semaphore(%259 : memref<!tpu.dma_semaphore, #tpu.memory_space<semaphore_mem>>)
      %c8_i32_140 = arith.constant 8 : i32
      %260 = arith.muli %c0_i32_109, %c8_i32_140 : i32
      %c3_i32_141 = arith.constant 3 : i32
      %261 = arith.addi %260, %c3_i32_141 : i32
      %262 = arith.addi %13, %261 : i32
      %263 = arith.index_cast %262 : i32 to index
      %264 = memref.load %arg2[%263] : memref<16xi32, #tpu.memory_space<smem>>
      %c8_i32_142 = arith.constant 8 : i32
      %c0_i32_143 = arith.constant 0 : i32
      %265 = arith.cmpi eq, %c8_i32_142, %c0_i32_143 : i32
      %c1_i32_144 = arith.constant 1 : i32
      %266 = arith.select %265, %c1_i32_144, %c8_i32_142 : i32
      %267 = arith.remsi %261, %266 : i32
      %c0_i32_145 = arith.constant 0 : i32
      %268 = arith.cmpi ne, %267, %c0_i32_145 : i32
      %c0_i32_146 = arith.constant 0 : i32
      %269 = arith.cmpi slt, %267, %c0_i32_146 : i32
      %c0_i32_147 = arith.constant 0 : i32
      %270 = arith.cmpi slt, %266, %c0_i32_147 : i32
      %271 = arith.xori %269, %270 : i1
      %272 = arith.andi %271, %268 : i1
      %273 = arith.addi %267, %266 : i32
      %274 = arith.select %272, %273, %267 : i32
      %c0_i32_148 = arith.constant 0 : i32
      %275 = tpu.memref_slice %arg3[%264, %c0_i32_148] : memref<64x128xf32, #tpu.memory_space<any>> -> memref<1x128xf32, #tpu.memory_space<any>>
      %276 = tpu.memref_squeeze %275 : memref<1x128xf32, #tpu.memory_space<any>> -> memref<128xf32, #tpu.memory_space<any>>
      %c0_i32_149 = arith.constant 0 : i32
      %277 = tpu.memref_slice %arg8[%196, %261, %c0_i32_149] : memref<2x8x128xf32, #tpu.memory_space<vmem>> -> memref<1x1x128xf32, #tpu.memory_space<vmem>>
      %278 = tpu.memref_squeeze %277 : memref<1x1x128xf32, #tpu.memory_space<vmem>> -> memref<128xf32, #tpu.memory_space<vmem>>
      %279 = tpu.memref_slice %arg9[%196, %274] : memref<2x8x!tpu.dma_semaphore, #tpu.memory_space<semaphore_mem>> -> memref<1x1x!tpu.dma_semaphore, #tpu.memory_space<semaphore_mem>>
      %280 = tpu.memref_squeeze %279 : memref<1x1x!tpu.dma_semaphore, #tpu.memory_space<semaphore_mem>> -> memref<!tpu.dma_semaphore, #tpu.memory_space<semaphore_mem>>
      tpu.enqueue_dma source(%276 : memref<128xf32, #tpu.memory_space<any>>) target(%278 : memref<128xf32, #tpu.memory_space<vmem>>) target_semaphore(%280 : memref<!tpu.dma_semaphore, #tpu.memory_space<semaphore_mem>>)
      %c8_i32_150 = arith.constant 8 : i32
      %281 = arith.muli %c0_i32_109, %c8_i32_150 : i32
      %c4_i32_151 = arith.constant 4 : i32
      %282 = arith.addi %281, %c4_i32_151 : i32
      %283 = arith.addi %13, %282 : i32
      %284 = arith.index_cast %283 : i32 to index
      %285 = memref.load %arg2[%284] : memref<16xi32, #tpu.memory_space<smem>>
      %c8_i32_152 = arith.constant 8 : i32
      %c0_i32_153 = arith.constant 0 : i32
      %286 = arith.cmpi eq, %c8_i32_152, %c0_i32_153 : i32
      %c1_i32_154 = arith.constant 1 : i32
      %287 = arith.select %286, %c1_i32_154, %c8_i32_152 : i32
      %288 = arith.remsi %282, %287 : i32
      %c0_i32_155 = arith.constant 0 : i32
      %289 = arith.cmpi ne, %288, %c0_i32_155 : i32
      %c0_i32_156 = arith.constant 0 : i32
      %290 = arith.cmpi slt, %288, %c0_i32_156 : i32
      %c0_i32_157 = arith.constant 0 : i32
      %291 = arith.cmpi slt, %287, %c0_i32_157 : i32
      %292 = arith.xori %290, %291 : i1
      %293 = arith.andi %292, %289 : i1
      %294 = arith.addi %288, %287 : i32
      %295 = arith.select %293, %294, %288 : i32
      %c0_i32_158 = arith.constant 0 : i32
      %296 = tpu.memref_slice %arg3[%285, %c0_i32_158] : memref<64x128xf32, #tpu.memory_space<any>> -> memref<1x128xf32, #tpu.memory_space<any>>
      %297 = tpu.memref_squeeze %296 : memref<1x128xf32, #tpu.memory_space<any>> -> memref<128xf32, #tpu.memory_space<any>>
      %c0_i32_159 = arith.constant 0 : i32
      %298 = tpu.memref_slice %arg8[%196, %282, %c0_i32_159] : memref<2x8x128xf32, #tpu.memory_space<vmem>> -> memref<1x1x128xf32, #tpu.memory_space<vmem>>
      %299 = tpu.memref_squeeze %298 : memref<1x1x128xf32, #tpu.memory_space<vmem>> -> memref<128xf32, #tpu.memory_space<vmem>>
      %300 = tpu.memref_slice %arg9[%196, %295] : memref<2x8x!tpu.dma_semaphore, #tpu.memory_space<semaphore_mem>> -> memref<1x1x!tpu.dma_semaphore, #tpu.memory_space<semaphore_mem>>
      %301 = tpu.memref_squeeze %300 : memref<1x1x!tpu.dma_semaphore, #tpu.memory_space<semaphore_mem>> -> memref<!tpu.dma_semaphore, #tpu.memory_space<semaphore_mem>>
      tpu.enqueue_dma source(%297 : memref<128xf32, #tpu.memory_space<any>>) target(%299 : memref<128xf32, #tpu.memory_space<vmem>>) target_semaphore(%301 : memref<!tpu.dma_semaphore, #tpu.memory_space<semaphore_mem>>)
      %c8_i32_160 = arith.constant 8 : i32
      %302 = arith.muli %c0_i32_109, %c8_i32_160 : i32
      %c5_i32_161 = arith.constant 5 : i32
      %303 = arith.addi %302, %c5_i32_161 : i32
      %304 = arith.addi %13, %303 : i32
      %305 = arith.index_cast %304 : i32 to index
      %306 = memref.load %arg2[%305] : memref<16xi32, #tpu.memory_space<smem>>
      %c8_i32_162 = arith.constant 8 : i32
      %c0_i32_163 = arith.constant 0 : i32
      %307 = arith.cmpi eq, %c8_i32_162, %c0_i32_163 : i32
      %c1_i32_164 = arith.constant 1 : i32
      %308 = arith.select %307, %c1_i32_164, %c8_i32_162 : i32
      %309 = arith.remsi %303, %308 : i32
      %c0_i32_165 = arith.constant 0 : i32
      %310 = arith.cmpi ne, %309, %c0_i32_165 : i32
      %c0_i32_166 = arith.constant 0 : i32
      %311 = arith.cmpi slt, %309, %c0_i32_166 : i32
      %c0_i32_167 = arith.constant 0 : i32
      %312 = arith.cmpi slt, %308, %c0_i32_167 : i32
      %313 = arith.xori %311, %312 : i1
      %314 = arith.andi %313, %310 : i1
      %315 = arith.addi %309, %308 : i32
      %316 = arith.select %314, %315, %309 : i32
      %c0_i32_168 = arith.constant 0 : i32
      %317 = tpu.memref_slice %arg3[%306, %c0_i32_168] : memref<64x128xf32, #tpu.memory_space<any>> -> memref<1x128xf32, #tpu.memory_space<any>>
      %318 = tpu.memref_squeeze %317 : memref<1x128xf32, #tpu.memory_space<any>> -> memref<128xf32, #tpu.memory_space<any>>
      %c0_i32_169 = arith.constant 0 : i32
      %319 = tpu.memref_slice %arg8[%196, %303, %c0_i32_169] : memref<2x8x128xf32, #tpu.memory_space<vmem>> -> memref<1x1x128xf32, #tpu.memory_space<vmem>>
      %320 = tpu.memref_squeeze %319 : memref<1x1x128xf32, #tpu.memory_space<vmem>> -> memref<128xf32, #tpu.memory_space<vmem>>
      %321 = tpu.memref_slice %arg9[%196, %316] : memref<2x8x!tpu.dma_semaphore, #tpu.memory_space<semaphore_mem>> -> memref<1x1x!tpu.dma_semaphore, #tpu.memory_space<semaphore_mem>>
      %322 = tpu.memref_squeeze %321 : memref<1x1x!tpu.dma_semaphore, #tpu.memory_space<semaphore_mem>> -> memref<!tpu.dma_semaphore, #tpu.memory_space<semaphore_mem>>
      tpu.enqueue_dma source(%318 : memref<128xf32, #tpu.memory_space<any>>) target(%320 : memref<128xf32, #tpu.memory_space<vmem>>) target_semaphore(%322 : memref<!tpu.dma_semaphore, #tpu.memory_space<semaphore_mem>>)
      %c8_i32_170 = arith.constant 8 : i32
      %323 = arith.muli %c0_i32_109, %c8_i32_170 : i32
      %c6_i32_171 = arith.constant 6 : i32
      %324 = arith.addi %323, %c6_i32_171 : i32
      %325 = arith.addi %13, %324 : i32
      %326 = arith.index_cast %325 : i32 to index
      %327 = memref.load %arg2[%326] : memref<16xi32, #tpu.memory_space<smem>>
      %c8_i32_172 = arith.constant 8 : i32
      %c0_i32_173 = arith.constant 0 : i32
      %328 = arith.cmpi eq, %c8_i32_172, %c0_i32_173 : i32
      %c1_i32_174 = arith.constant 1 : i32
      %329 = arith.select %328, %c1_i32_174, %c8_i32_172 : i32
      %330 = arith.remsi %324, %329 : i32
      %c0_i32_175 = arith.constant 0 : i32
      %331 = arith.cmpi ne, %330, %c0_i32_175 : i32
      %c0_i32_176 = arith.constant 0 : i32
      %332 = arith.cmpi slt, %330, %c0_i32_176 : i32
      %c0_i32_177 = arith.constant 0 : i32
      %333 = arith.cmpi slt, %329, %c0_i32_177 : i32
      %334 = arith.xori %332, %333 : i1
      %335 = arith.andi %334, %331 : i1
      %336 = arith.addi %330, %329 : i32
      %337 = arith.select %335, %336, %330 : i32
      %c0_i32_178 = arith.constant 0 : i32
      %338 = tpu.memref_slice %arg3[%327, %c0_i32_178] : memref<64x128xf32, #tpu.memory_space<any>> -> memref<1x128xf32, #tpu.memory_space<any>>
      %339 = tpu.memref_squeeze %338 : memref<1x128xf32, #tpu.memory_space<any>> -> memref<128xf32, #tpu.memory_space<any>>
      %c0_i32_179 = arith.constant 0 : i32
      %340 = tpu.memref_slice %arg8[%196, %324, %c0_i32_179] : memref<2x8x128xf32, #tpu.memory_space<vmem>> -> memref<1x1x128xf32, #tpu.memory_space<vmem>>
      %341 = tpu.memref_squeeze %340 : memref<1x1x128xf32, #tpu.memory_space<vmem>> -> memref<128xf32, #tpu.memory_space<vmem>>
      %342 = tpu.memref_slice %arg9[%196, %337] : memref<2x8x!tpu.dma_semaphore, #tpu.memory_space<semaphore_mem>> -> memref<1x1x!tpu.dma_semaphore, #tpu.memory_space<semaphore_mem>>
      %343 = tpu.memref_squeeze %342 : memref<1x1x!tpu.dma_semaphore, #tpu.memory_space<semaphore_mem>> -> memref<!tpu.dma_semaphore, #tpu.memory_space<semaphore_mem>>
      tpu.enqueue_dma source(%339 : memref<128xf32, #tpu.memory_space<any>>) target(%341 : memref<128xf32, #tpu.memory_space<vmem>>) target_semaphore(%343 : memref<!tpu.dma_semaphore, #tpu.memory_space<semaphore_mem>>)
      %c8_i32_180 = arith.constant 8 : i32
      %344 = arith.muli %c0_i32_109, %c8_i32_180 : i32
      %c7_i32_181 = arith.constant 7 : i32
      %345 = arith.addi %344, %c7_i32_181 : i32
      %346 = arith.addi %13, %345 : i32
      %347 = arith.index_cast %346 : i32 to index
      %348 = memref.load %arg2[%347] : memref<16xi32, #tpu.memory_space<smem>>
      %c8_i32_182 = arith.constant 8 : i32
      %c0_i32_183 = arith.constant 0 : i32
      %349 = arith.cmpi eq, %c8_i32_182, %c0_i32_183 : i32
      %c1_i32_184 = arith.constant 1 : i32
      %350 = arith.select %349, %c1_i32_184, %c8_i32_182 : i32
      %351 = arith.remsi %345, %350 : i32
      %c0_i32_185 = arith.constant 0 : i32
      %352 = arith.cmpi ne, %351, %c0_i32_185 : i32
      %c0_i32_186 = arith.constant 0 : i32
      %353 = arith.cmpi slt, %351, %c0_i32_186 : i32
      %c0_i32_187 = arith.constant 0 : i32
      %354 = arith.cmpi slt, %350, %c0_i32_187 : i32
      %355 = arith.xori %353, %354 : i1
      %356 = arith.andi %355, %352 : i1
      %357 = arith.addi %351, %350 : i32
      %358 = arith.select %356, %357, %351 : i32
      %c0_i32_188 = arith.constant 0 : i32
      %359 = tpu.memref_slice %arg3[%348, %c0_i32_188] : memref<64x128xf32, #tpu.memory_space<any>> -> memref<1x128xf32, #tpu.memory_space<any>>
      %360 = tpu.memref_squeeze %359 : memref<1x128xf32, #tpu.memory_space<any>> -> memref<128xf32, #tpu.memory_space<any>>
      %c0_i32_189 = arith.constant 0 : i32
      %361 = tpu.memref_slice %arg8[%196, %345, %c0_i32_189] : memref<2x8x128xf32, #tpu.memory_space<vmem>> -> memref<1x1x128xf32, #tpu.memory_space<vmem>>
      %362 = tpu.memref_squeeze %361 : memref<1x1x128xf32, #tpu.memory_space<vmem>> -> memref<128xf32, #tpu.memory_space<vmem>>
      %363 = tpu.memref_slice %arg9[%196, %358] : memref<2x8x!tpu.dma_semaphore, #tpu.memory_space<semaphore_mem>> -> memref<1x1x!tpu.dma_semaphore, #tpu.memory_space<semaphore_mem>>
      %364 = tpu.memref_squeeze %363 : memref<1x1x!tpu.dma_semaphore, #tpu.memory_space<semaphore_mem>> -> memref<!tpu.dma_semaphore, #tpu.memory_space<semaphore_mem>>
      tpu.enqueue_dma source(%360 : memref<128xf32, #tpu.memory_space<any>>) target(%362 : memref<128xf32, #tpu.memory_space<vmem>>) target_semaphore(%364 : memref<!tpu.dma_semaphore, #tpu.memory_space<semaphore_mem>>)
      %c1_i32_190 = arith.constant 1 : i32
    } else {
    }
    %c0 = arith.constant 0 : index
    %c0_10 = arith.constant 0 : index
    %c0_11 = arith.constant 0 : index
    %21 = vector.load %arg4[%c0, %c0_10, %c0_11] : memref<1x8x1xi32, #tpu.memory_space<vmem>>, vector<1x8x1xi32>
    %22 = vector.shape_cast %21 : vector<1x8x1xi32> to vector<8x1xi32>
    %c0_12 = arith.constant 0 : index
    %c0_13 = arith.constant 0 : index
    %23 = vector.load %arg5[%c0_12, %c0_13] : memref<3x128xf32, #tpu.memory_space<vmem>>, vector<3x128xf32>
    %24 = vector.extract_strided_slice %23 {offsets = [0, 0], sizes = [1, 128], strides = [1, 1]} : vector<3x128xf32> to vector<1x128xf32>
    %25 = vector.extract_strided_slice %23 {offsets = [1, 0], sizes = [1, 128], strides = [1, 1]} : vector<3x128xf32> to vector<1x128xf32>
    %26 = vector.extract_strided_slice %23 {offsets = [2, 0], sizes = [1, 128], strides = [1, 1]} : vector<3x128xf32> to vector<1x128xf32>
    %c0_i32_14 = arith.constant 0 : i32
    %27 = vector.broadcast %c0_i32_14 : i32 to vector<8x1xi32>
    %28 = arith.cmpi eq, %22, %27 : vector<8x1xi32>
    %c1_i32_15 = arith.constant 1 : i32
    %29 = vector.broadcast %c1_i32_15 : i32 to vector<8x1xi32>
    %30 = arith.cmpi eq, %22, %29 : vector<8x1xi32>
    %31 = vector.shape_cast %30 : vector<8x1xi1> to vector<8x1xi1>
    %32 = vector.broadcast %31 : vector<8x1xi1> to vector<8x128xi1>
    %33 = vector.shape_cast %25 : vector<1x128xf32> to vector<1x128xf32>
    %34 = vector.broadcast %33 : vector<1x128xf32> to vector<8x128xf32>
    %35 = vector.shape_cast %26 : vector<1x128xf32> to vector<1x128xf32>
    %36 = vector.broadcast %35 : vector<1x128xf32> to vector<8x128xf32>
    %37 = arith.select %32, %34, %36 : vector<8x128xi1>, vector<8x128xf32>
    %38 = vector.shape_cast %28 : vector<8x1xi1> to vector<8x1xi1>
    %39 = vector.broadcast %38 : vector<8x1xi1> to vector<8x128xi1>
    %40 = vector.shape_cast %24 : vector<1x128xf32> to vector<1x128xf32>
    %41 = vector.broadcast %40 : vector<1x128xf32> to vector<8x128xf32>
    %42 = arith.select %39, %41, %37 : vector<8x128xi1>, vector<8x128xf32>
    %c0_16 = arith.constant 0 : index
    %c0_17 = arith.constant 0 : index
    %43 = vector.load %arg6[%c0_16, %c0_17] : memref<8x128xf32, #tpu.memory_space<vmem>>, vector<8x128xf32>
    %44 = arith.addf %42, %43 : vector<8x128xf32>
    %c0_i32_18 = arith.constant 0 : i32
    %c8_i32_19 = arith.constant 8 : i32
    %45 = arith.muli %c0_i32_18, %c8_i32_19 : i32
    %c0_i32_20 = arith.constant 0 : i32
    %46 = arith.addi %45, %c0_i32_20 : i32
    %c8_i32_21 = arith.constant 8 : i32
    %c0_i32_22 = arith.constant 0 : i32
    %47 = arith.cmpi eq, %c8_i32_21, %c0_i32_22 : i32
    %c1_i32_23 = arith.constant 1 : i32
    %48 = arith.select %47, %c1_i32_23, %c8_i32_21 : i32
    %49 = arith.remsi %46, %48 : i32
    %c0_i32_24 = arith.constant 0 : i32
    %50 = arith.cmpi ne, %49, %c0_i32_24 : i32
    %c0_i32_25 = arith.constant 0 : i32
    %51 = arith.cmpi slt, %49, %c0_i32_25 : i32
    %c0_i32_26 = arith.constant 0 : i32
    %52 = arith.cmpi slt, %48, %c0_i32_26 : i32
    %53 = arith.xori %51, %52 : i1
    %54 = arith.andi %53, %50 : i1
    %55 = arith.addi %49, %48 : i32
    %56 = arith.select %54, %55, %49 : i32
    %c0_i32_27 = arith.constant 0 : i32
    %c0_i32_28 = arith.constant 0 : i32
    %57 = tpu.memref_slice %arg3[%c0_i32_27, %c0_i32_28] : memref<64x128xf32, #tpu.memory_space<any>> -> memref<1x128xf32, #tpu.memory_space<any>>
    %58 = tpu.memref_squeeze %57 : memref<1x128xf32, #tpu.memory_space<any>> -> memref<128xf32, #tpu.memory_space<any>>
    %c0_i32_29 = arith.constant 0 : i32
    %59 = tpu.memref_slice %arg8[%9, %46, %c0_i32_29] : memref<2x8x128xf32, #tpu.memory_space<vmem>> -> memref<1x1x128xf32, #tpu.memory_space<vmem>>
    %60 = tpu.memref_squeeze %59 : memref<1x1x128xf32, #tpu.memory_space<vmem>> -> memref<128xf32, #tpu.memory_space<vmem>>
    %61 = tpu.memref_slice %arg9[%9, %56] : memref<2x8x!tpu.dma_semaphore, #tpu.memory_space<semaphore_mem>> -> memref<1x1x!tpu.dma_semaphore, #tpu.memory_space<semaphore_mem>>
    %62 = tpu.memref_squeeze %61 : memref<1x1x!tpu.dma_semaphore, #tpu.memory_space<semaphore_mem>> -> memref<!tpu.dma_semaphore, #tpu.memory_space<semaphore_mem>>
    tpu.wait_dma2 semaphore(%62 : memref<!tpu.dma_semaphore, #tpu.memory_space<semaphore_mem>>) src(%58 : memref<128xf32, #tpu.memory_space<any>>) dst(%60 : memref<128xf32, #tpu.memory_space<vmem>>)
    %c8_i32_30 = arith.constant 8 : i32
    %63 = arith.muli %c0_i32_18, %c8_i32_30 : i32
    %c1_i32_31 = arith.constant 1 : i32
    %64 = arith.addi %63, %c1_i32_31 : i32
    %c8_i32_32 = arith.constant 8 : i32
    %c0_i32_33 = arith.constant 0 : i32
    %65 = arith.cmpi eq, %c8_i32_32, %c0_i32_33 : i32
    %c1_i32_34 = arith.constant 1 : i32
    %66 = arith.select %65, %c1_i32_34, %c8_i32_32 : i32
    %67 = arith.remsi %64, %66 : i32
    %c0_i32_35 = arith.constant 0 : i32
    %68 = arith.cmpi ne, %67, %c0_i32_35 : i32
    %c0_i32_36 = arith.constant 0 : i32
    %69 = arith.cmpi slt, %67, %c0_i32_36 : i32
    %c0_i32_37 = arith.constant 0 : i32
    %70 = arith.cmpi slt, %66, %c0_i32_37 : i32
    %71 = arith.xori %69, %70 : i1
    %72 = arith.andi %71, %68 : i1
    %73 = arith.addi %67, %66 : i32
    %74 = arith.select %72, %73, %67 : i32
    %c0_i32_38 = arith.constant 0 : i32
    %c0_i32_39 = arith.constant 0 : i32
    %75 = tpu.memref_slice %arg3[%c0_i32_38, %c0_i32_39] : memref<64x128xf32, #tpu.memory_space<any>> -> memref<1x128xf32, #tpu.memory_space<any>>
    %76 = tpu.memref_squeeze %75 : memref<1x128xf32, #tpu.memory_space<any>> -> memref<128xf32, #tpu.memory_space<any>>
    %c0_i32_40 = arith.constant 0 : i32
    %77 = tpu.memref_slice %arg8[%9, %64, %c0_i32_40] : memref<2x8x128xf32, #tpu.memory_space<vmem>> -> memref<1x1x128xf32, #tpu.memory_space<vmem>>
    %78 = tpu.memref_squeeze %77 : memref<1x1x128xf32, #tpu.memory_space<vmem>> -> memref<128xf32, #tpu.memory_space<vmem>>
    %79 = tpu.memref_slice %arg9[%9, %74] : memref<2x8x!tpu.dma_semaphore, #tpu.memory_space<semaphore_mem>> -> memref<1x1x!tpu.dma_semaphore, #tpu.memory_space<semaphore_mem>>
    %80 = tpu.memref_squeeze %79 : memref<1x1x!tpu.dma_semaphore, #tpu.memory_space<semaphore_mem>> -> memref<!tpu.dma_semaphore, #tpu.memory_space<semaphore_mem>>
    tpu.wait_dma2 semaphore(%80 : memref<!tpu.dma_semaphore, #tpu.memory_space<semaphore_mem>>) src(%76 : memref<128xf32, #tpu.memory_space<any>>) dst(%78 : memref<128xf32, #tpu.memory_space<vmem>>)
    %c8_i32_41 = arith.constant 8 : i32
    %81 = arith.muli %c0_i32_18, %c8_i32_41 : i32
    %c2_i32_42 = arith.constant 2 : i32
    %82 = arith.addi %81, %c2_i32_42 : i32
    %c8_i32_43 = arith.constant 8 : i32
    %c0_i32_44 = arith.constant 0 : i32
    %83 = arith.cmpi eq, %c8_i32_43, %c0_i32_44 : i32
    %c1_i32_45 = arith.constant 1 : i32
    %84 = arith.select %83, %c1_i32_45, %c8_i32_43 : i32
    %85 = arith.remsi %82, %84 : i32
    %c0_i32_46 = arith.constant 0 : i32
    %86 = arith.cmpi ne, %85, %c0_i32_46 : i32
    %c0_i32_47 = arith.constant 0 : i32
    %87 = arith.cmpi slt, %85, %c0_i32_47 : i32
    %c0_i32_48 = arith.constant 0 : i32
    %88 = arith.cmpi slt, %84, %c0_i32_48 : i32
    %89 = arith.xori %87, %88 : i1
    %90 = arith.andi %89, %86 : i1
    %91 = arith.addi %85, %84 : i32
    %92 = arith.select %90, %91, %85 : i32
    %c0_i32_49 = arith.constant 0 : i32
    %c0_i32_50 = arith.constant 0 : i32
    %93 = tpu.memref_slice %arg3[%c0_i32_49, %c0_i32_50] : memref<64x128xf32, #tpu.memory_space<any>> -> memref<1x128xf32, #tpu.memory_space<any>>
    %94 = tpu.memref_squeeze %93 : memref<1x128xf32, #tpu.memory_space<any>> -> memref<128xf32, #tpu.memory_space<any>>
    %c0_i32_51 = arith.constant 0 : i32
    %95 = tpu.memref_slice %arg8[%9, %82, %c0_i32_51] : memref<2x8x128xf32, #tpu.memory_space<vmem>> -> memref<1x1x128xf32, #tpu.memory_space<vmem>>
    %96 = tpu.memref_squeeze %95 : memref<1x1x128xf32, #tpu.memory_space<vmem>> -> memref<128xf32, #tpu.memory_space<vmem>>
    %97 = tpu.memref_slice %arg9[%9, %92] : memref<2x8x!tpu.dma_semaphore, #tpu.memory_space<semaphore_mem>> -> memref<1x1x!tpu.dma_semaphore, #tpu.memory_space<semaphore_mem>>
    %98 = tpu.memref_squeeze %97 : memref<1x1x!tpu.dma_semaphore, #tpu.memory_space<semaphore_mem>> -> memref<!tpu.dma_semaphore, #tpu.memory_space<semaphore_mem>>
    tpu.wait_dma2 semaphore(%98 : memref<!tpu.dma_semaphore, #tpu.memory_space<semaphore_mem>>) src(%94 : memref<128xf32, #tpu.memory_space<any>>) dst(%96 : memref<128xf32, #tpu.memory_space<vmem>>)
    %c8_i32_52 = arith.constant 8 : i32
    %99 = arith.muli %c0_i32_18, %c8_i32_52 : i32
    %c3_i32 = arith.constant 3 : i32
    %100 = arith.addi %99, %c3_i32 : i32
    %c8_i32_53 = arith.constant 8 : i32
    %c0_i32_54 = arith.constant 0 : i32
    %101 = arith.cmpi eq, %c8_i32_53, %c0_i32_54 : i32
    %c1_i32_55 = arith.constant 1 : i32
    %102 = arith.select %101, %c1_i32_55, %c8_i32_53 : i32
    %103 = arith.remsi %100, %102 : i32
    %c0_i32_56 = arith.constant 0 : i32
    %104 = arith.cmpi ne, %103, %c0_i32_56 : i32
    %c0_i32_57 = arith.constant 0 : i32
    %105 = arith.cmpi slt, %103, %c0_i32_57 : i32
    %c0_i32_58 = arith.constant 0 : i32
    %106 = arith.cmpi slt, %102, %c0_i32_58 : i32
    %107 = arith.xori %105, %106 : i1
    %108 = arith.andi %107, %104 : i1
    %109 = arith.addi %103, %102 : i32
    %110 = arith.select %108, %109, %103 : i32
    %c0_i32_59 = arith.constant 0 : i32
    %c0_i32_60 = arith.constant 0 : i32
    %111 = tpu.memref_slice %arg3[%c0_i32_59, %c0_i32_60] : memref<64x128xf32, #tpu.memory_space<any>> -> memref<1x128xf32, #tpu.memory_space<any>>
    %112 = tpu.memref_squeeze %111 : memref<1x128xf32, #tpu.memory_space<any>> -> memref<128xf32, #tpu.memory_space<any>>
    %c0_i32_61 = arith.constant 0 : i32
    %113 = tpu.memref_slice %arg8[%9, %100, %c0_i32_61] : memref<2x8x128xf32, #tpu.memory_space<vmem>> -> memref<1x1x128xf32, #tpu.memory_space<vmem>>
    %114 = tpu.memref_squeeze %113 : memref<1x1x128xf32, #tpu.memory_space<vmem>> -> memref<128xf32, #tpu.memory_space<vmem>>
    %115 = tpu.memref_slice %arg9[%9, %110] : memref<2x8x!tpu.dma_semaphore, #tpu.memory_space<semaphore_mem>> -> memref<1x1x!tpu.dma_semaphore, #tpu.memory_space<semaphore_mem>>
    %116 = tpu.memref_squeeze %115 : memref<1x1x!tpu.dma_semaphore, #tpu.memory_space<semaphore_mem>> -> memref<!tpu.dma_semaphore, #tpu.memory_space<semaphore_mem>>
    tpu.wait_dma2 semaphore(%116 : memref<!tpu.dma_semaphore, #tpu.memory_space<semaphore_mem>>) src(%112 : memref<128xf32, #tpu.memory_space<any>>) dst(%114 : memref<128xf32, #tpu.memory_space<vmem>>)
    %c8_i32_62 = arith.constant 8 : i32
    %117 = arith.muli %c0_i32_18, %c8_i32_62 : i32
    %c4_i32 = arith.constant 4 : i32
    %118 = arith.addi %117, %c4_i32 : i32
    %c8_i32_63 = arith.constant 8 : i32
    %c0_i32_64 = arith.constant 0 : i32
    %119 = arith.cmpi eq, %c8_i32_63, %c0_i32_64 : i32
    %c1_i32_65 = arith.constant 1 : i32
    %120 = arith.select %119, %c1_i32_65, %c8_i32_63 : i32
    %121 = arith.remsi %118, %120 : i32
    %c0_i32_66 = arith.constant 0 : i32
    %122 = arith.cmpi ne, %121, %c0_i32_66 : i32
    %c0_i32_67 = arith.constant 0 : i32
    %123 = arith.cmpi slt, %121, %c0_i32_67 : i32
    %c0_i32_68 = arith.constant 0 : i32
    %124 = arith.cmpi slt, %120, %c0_i32_68 : i32
    %125 = arith.xori %123, %124 : i1
    %126 = arith.andi %125, %122 : i1
    %127 = arith.addi %121, %120 : i32
    %128 = arith.select %126, %127, %121 : i32
    %c0_i32_69 = arith.constant 0 : i32
    %c0_i32_70 = arith.constant 0 : i32
    %129 = tpu.memref_slice %arg3[%c0_i32_69, %c0_i32_70] : memref<64x128xf32, #tpu.memory_space<any>> -> memref<1x128xf32, #tpu.memory_space<any>>
    %130 = tpu.memref_squeeze %129 : memref<1x128xf32, #tpu.memory_space<any>> -> memref<128xf32, #tpu.memory_space<any>>
    %c0_i32_71 = arith.constant 0 : i32
    %131 = tpu.memref_slice %arg8[%9, %118, %c0_i32_71] : memref<2x8x128xf32, #tpu.memory_space<vmem>> -> memref<1x1x128xf32, #tpu.memory_space<vmem>>
    %132 = tpu.memref_squeeze %131 : memref<1x1x128xf32, #tpu.memory_space<vmem>> -> memref<128xf32, #tpu.memory_space<vmem>>
    %133 = tpu.memref_slice %arg9[%9, %128] : memref<2x8x!tpu.dma_semaphore, #tpu.memory_space<semaphore_mem>> -> memref<1x1x!tpu.dma_semaphore, #tpu.memory_space<semaphore_mem>>
    %134 = tpu.memref_squeeze %133 : memref<1x1x!tpu.dma_semaphore, #tpu.memory_space<semaphore_mem>> -> memref<!tpu.dma_semaphore, #tpu.memory_space<semaphore_mem>>
    tpu.wait_dma2 semaphore(%134 : memref<!tpu.dma_semaphore, #tpu.memory_space<semaphore_mem>>) src(%130 : memref<128xf32, #tpu.memory_space<any>>) dst(%132 : memref<128xf32, #tpu.memory_space<vmem>>)
    %c8_i32_72 = arith.constant 8 : i32
    %135 = arith.muli %c0_i32_18, %c8_i32_72 : i32
    %c5_i32 = arith.constant 5 : i32
    %136 = arith.addi %135, %c5_i32 : i32
    %c8_i32_73 = arith.constant 8 : i32
    %c0_i32_74 = arith.constant 0 : i32
    %137 = arith.cmpi eq, %c8_i32_73, %c0_i32_74 : i32
    %c1_i32_75 = arith.constant 1 : i32
    %138 = arith.select %137, %c1_i32_75, %c8_i32_73 : i32
    %139 = arith.remsi %136, %138 : i32
    %c0_i32_76 = arith.constant 0 : i32
    %140 = arith.cmpi ne, %139, %c0_i32_76 : i32
    %c0_i32_77 = arith.constant 0 : i32
    %141 = arith.cmpi slt, %139, %c0_i32_77 : i32
    %c0_i32_78 = arith.constant 0 : i32
    %142 = arith.cmpi slt, %138, %c0_i32_78 : i32
    %143 = arith.xori %141, %142 : i1
    %144 = arith.andi %143, %140 : i1
    %145 = arith.addi %139, %138 : i32
    %146 = arith.select %144, %145, %139 : i32
    %c0_i32_79 = arith.constant 0 : i32
    %c0_i32_80 = arith.constant 0 : i32
    %147 = tpu.memref_slice %arg3[%c0_i32_79, %c0_i32_80] : memref<64x128xf32, #tpu.memory_space<any>> -> memref<1x128xf32, #tpu.memory_space<any>>
    %148 = tpu.memref_squeeze %147 : memref<1x128xf32, #tpu.memory_space<any>> -> memref<128xf32, #tpu.memory_space<any>>
    %c0_i32_81 = arith.constant 0 : i32
    %149 = tpu.memref_slice %arg8[%9, %136, %c0_i32_81] : memref<2x8x128xf32, #tpu.memory_space<vmem>> -> memref<1x1x128xf32, #tpu.memory_space<vmem>>
    %150 = tpu.memref_squeeze %149 : memref<1x1x128xf32, #tpu.memory_space<vmem>> -> memref<128xf32, #tpu.memory_space<vmem>>
    %151 = tpu.memref_slice %arg9[%9, %146] : memref<2x8x!tpu.dma_semaphore, #tpu.memory_space<semaphore_mem>> -> memref<1x1x!tpu.dma_semaphore, #tpu.memory_space<semaphore_mem>>
    %152 = tpu.memref_squeeze %151 : memref<1x1x!tpu.dma_semaphore, #tpu.memory_space<semaphore_mem>> -> memref<!tpu.dma_semaphore, #tpu.memory_space<semaphore_mem>>
    tpu.wait_dma2 semaphore(%152 : memref<!tpu.dma_semaphore, #tpu.memory_space<semaphore_mem>>) src(%148 : memref<128xf32, #tpu.memory_space<any>>) dst(%150 : memref<128xf32, #tpu.memory_space<vmem>>)
    %c8_i32_82 = arith.constant 8 : i32
    %153 = arith.muli %c0_i32_18, %c8_i32_82 : i32
    %c6_i32 = arith.constant 6 : i32
    %154 = arith.addi %153, %c6_i32 : i32
    %c8_i32_83 = arith.constant 8 : i32
    %c0_i32_84 = arith.constant 0 : i32
    %155 = arith.cmpi eq, %c8_i32_83, %c0_i32_84 : i32
    %c1_i32_85 = arith.constant 1 : i32
    %156 = arith.select %155, %c1_i32_85, %c8_i32_83 : i32
    %157 = arith.remsi %154, %156 : i32
    %c0_i32_86 = arith.constant 0 : i32
    %158 = arith.cmpi ne, %157, %c0_i32_86 : i32
    %c0_i32_87 = arith.constant 0 : i32
    %159 = arith.cmpi slt, %157, %c0_i32_87 : i32
    %c0_i32_88 = arith.constant 0 : i32
    %160 = arith.cmpi slt, %156, %c0_i32_88 : i32
    %161 = arith.xori %159, %160 : i1
    %162 = arith.andi %161, %158 : i1
    %163 = arith.addi %157, %156 : i32
    %164 = arith.select %162, %163, %157 : i32
    %c0_i32_89 = arith.constant 0 : i32
    %c0_i32_90 = arith.constant 0 : i32
    %165 = tpu.memref_slice %arg3[%c0_i32_89, %c0_i32_90] : memref<64x128xf32, #tpu.memory_space<any>> -> memref<1x128xf32, #tpu.memory_space<any>>
    %166 = tpu.memref_squeeze %165 : memref<1x128xf32, #tpu.memory_space<any>> -> memref<128xf32, #tpu.memory_space<any>>
    %c0_i32_91 = arith.constant 0 : i32
    %167 = tpu.memref_slice %arg8[%9, %154, %c0_i32_91] : memref<2x8x128xf32, #tpu.memory_space<vmem>> -> memref<1x1x128xf32, #tpu.memory_space<vmem>>
    %168 = tpu.memref_squeeze %167 : memref<1x1x128xf32, #tpu.memory_space<vmem>> -> memref<128xf32, #tpu.memory_space<vmem>>
    %169 = tpu.memref_slice %arg9[%9, %164] : memref<2x8x!tpu.dma_semaphore, #tpu.memory_space<semaphore_mem>> -> memref<1x1x!tpu.dma_semaphore, #tpu.memory_space<semaphore_mem>>
    %170 = tpu.memref_squeeze %169 : memref<1x1x!tpu.dma_semaphore, #tpu.memory_space<semaphore_mem>> -> memref<!tpu.dma_semaphore, #tpu.memory_space<semaphore_mem>>
    tpu.wait_dma2 semaphore(%170 : memref<!tpu.dma_semaphore, #tpu.memory_space<semaphore_mem>>) src(%166 : memref<128xf32, #tpu.memory_space<any>>) dst(%168 : memref<128xf32, #tpu.memory_space<vmem>>)
    %c8_i32_92 = arith.constant 8 : i32
    %171 = arith.muli %c0_i32_18, %c8_i32_92 : i32
    %c7_i32 = arith.constant 7 : i32
    %172 = arith.addi %171, %c7_i32 : i32
    %c8_i32_93 = arith.constant 8 : i32
    %c0_i32_94 = arith.constant 0 : i32
    %173 = arith.cmpi eq, %c8_i32_93, %c0_i32_94 : i32
    %c1_i32_95 = arith.constant 1 : i32
    %174 = arith.select %173, %c1_i32_95, %c8_i32_93 : i32
    %175 = arith.remsi %172, %174 : i32
    %c0_i32_96 = arith.constant 0 : i32
    %176 = arith.cmpi ne, %175, %c0_i32_96 : i32
    %c0_i32_97 = arith.constant 0 : i32
    %177 = arith.cmpi slt, %175, %c0_i32_97 : i32
    %c0_i32_98 = arith.constant 0 : i32
    %178 = arith.cmpi slt, %174, %c0_i32_98 : i32
    %179 = arith.xori %177, %178 : i1
    %180 = arith.andi %179, %176 : i1
    %181 = arith.addi %175, %174 : i32
    %182 = arith.select %180, %181, %175 : i32
    %c0_i32_99 = arith.constant 0 : i32
    %c0_i32_100 = arith.constant 0 : i32
    %183 = tpu.memref_slice %arg3[%c0_i32_99, %c0_i32_100] : memref<64x128xf32, #tpu.memory_space<any>> -> memref<1x128xf32, #tpu.memory_space<any>>
    %184 = tpu.memref_squeeze %183 : memref<1x128xf32, #tpu.memory_space<any>> -> memref<128xf32, #tpu.memory_space<any>>
    %c0_i32_101 = arith.constant 0 : i32
    %185 = tpu.memref_slice %arg8[%9, %172, %c0_i32_101] : memref<2x8x128xf32, #tpu.memory_space<vmem>> -> memref<1x1x128xf32, #tpu.memory_space<vmem>>
    %186 = tpu.memref_squeeze %185 : memref<1x1x128xf32, #tpu.memory_space<vmem>> -> memref<128xf32, #tpu.memory_space<vmem>>
    %187 = tpu.memref_slice %arg9[%9, %182] : memref<2x8x!tpu.dma_semaphore, #tpu.memory_space<semaphore_mem>> -> memref<1x1x!tpu.dma_semaphore, #tpu.memory_space<semaphore_mem>>
    %188 = tpu.memref_squeeze %187 : memref<1x1x!tpu.dma_semaphore, #tpu.memory_space<semaphore_mem>> -> memref<!tpu.dma_semaphore, #tpu.memory_space<semaphore_mem>>
    tpu.wait_dma2 semaphore(%188 : memref<!tpu.dma_semaphore, #tpu.memory_space<semaphore_mem>>) src(%184 : memref<128xf32, #tpu.memory_space<any>>) dst(%186 : memref<128xf32, #tpu.memory_space<vmem>>)
    %c1_i32_102 = arith.constant 1 : i32
    %189 = arith.index_cast %9 : i32 to index
    %c0_103 = arith.constant 0 : index
    %c0_104 = arith.constant 0 : index
    %190 = vector.load %arg8[%189, %c0_103, %c0_104] : memref<2x8x128xf32, #tpu.memory_space<vmem>>, vector<1x8x128xf32>
    %191 = vector.shape_cast %190 : vector<1x8x128xf32> to vector<8x128xf32>
    %192 = arith.addf %191, %44 : vector<8x128xf32>
    %c0_105 = arith.constant 0 : index
    %c0_106 = arith.constant 0 : index
    %c0_107 = arith.constant 0 : index
    %193 = vector.load %arg7[%c0_105, %c0_106, %c0_107] : memref<1x8x128xf32, #tpu.memory_space<vmem>>, vector<1x8x128xf32>
    %194 = vector.shape_cast %193 : vector<1x8x128xf32> to vector<8x128xf32>
    %195 = vector.shape_cast %192 : vector<8x128xf32> to vector<1x8x128xf32>
    tpu.vector_store %arg7[%c0_105, %c0_106, %c0_107], %195 {strides = array<i32>} : memref<1x8x128xf32, #tpu.memory_space<vmem>>, vector<1x8x128xf32>,
    return
  }
  func.func @transform_1(%arg0: i32, %arg1: i32, %arg2: memref<16xi32, #tpu.memory_space<smem>>) -> (i32, i32, i32) {
    %c0_i32 = arith.constant 0 : i32
    %c0_i32_0 = arith.constant 0 : i32
    return %arg0, %arg1, %c0_i32 : i32, i32, i32
  }
  func.func @transform_2(%arg0: i32, %arg1: i32, %arg2: memref<16xi32, #tpu.memory_space<smem>>) -> (i32, i32) {
    %c0_i32 = arith.constant 0 : i32
    %c0_i32_0 = arith.constant 0 : i32
    %c0_i32_1 = arith.constant 0 : i32
    return %c0_i32, %c0_i32_0 : i32, i32
  }
  func.func @transform_3(%arg0: i32, %arg1: i32, %arg2: memref<16xi32, #tpu.memory_space<smem>>) -> (i32, i32) {
    %c0_i32 = arith.constant 0 : i32
    %c0_i32_0 = arith.constant 0 : i32
    return %arg1, %c0_i32 : i32, i32
  }
  func.func @transform_4(%arg0: i32, %arg1: i32, %arg2: memref<16xi32, #tpu.memory_space<smem>>) -> (i32, i32, i32) {
    %c0_i32 = arith.constant 0 : i32
    %c0_i32_0 = arith.constant 0 : i32
    return %arg0, %arg1, %c0_i32 : i32, i32, i32
  }
}

</mosaic_0001>

<llo_original>
// kernel: tpu_custom_call.1
$region0: #{tpu_custom_call.1}
  #allocation0 [shape = 'u32[]', space=smem, size = 0x4, offset = 0x4, fixed_abs, tag = 'smem constant byte address 0x4 - core index']
  #allocation1 [shape = 'u32[144,128]{1,0:T(1,128)}', space=vmem, size = 0x12000, scoped, tag = 'internal scratch']
  #allocation2 [shape = 'f32[2,8,128]{2,1,0:T(8,128)}', space=vmem, size = 0x2000, scoped, tag = 'scratch operand']
  #allocation3 [shape = 's32[16]{0}', space=sflag, size = 0x40, scoped, tag = 'scratch operand']
  #allocation4 [shape = 's32[1]{0}', space=sflag, size = 0x4, scoped, tag = 'scoped memory for tpu_custom_call.1']
  #allocation5 [shape = 'u8[512]{0}', space=smem, size = 0x200, scoped, tag = 'prefetched SMEM operand 0']
  #allocation8 [shape = 's32[]', space=sflag, size = 0x4, offset = 0, fixed_abs, tag = 'sflag constant byte address 0x0 - dummy sync flag']
  #allocation9 [shape = 's32[]', space=sflag, size = 0x4, offset = 0, fixed_abs, tag = 'sflag constant byte address 0x0 - dummy sync flag']
  #allocation10 [shape = 'u32[]', space=smem, size = 0x4, offset = 0x44, fixed_abs, tag = 'smem constant byte address 0x44 - assertion arg 0']
  #allocation11 [shape = 'u32[]', space=smem, size = 0x4, offset = 0x48, fixed_abs, tag = 'smem constant byte address 0x48 - assertion arg 1']
  #allocation12 [shape = 's32[]', space=sflag, size = 0x4, offset = 0, fixed_abs, tag = 'sflag constant byte address 0x0 - dummy sync flag']
  #allocation13 [shape = 's32[]', space=sflag, size = 0x4, offset = 0, fixed_abs, tag = 'sflag constant byte address 0x0 - dummy sync flag']
  #allocation14 [shape = 's32[]', space=sflag, size = 0x4, offset = 0, fixed_abs, tag = 'sflag constant byte address 0x0 - dummy sync flag']
  #allocation15 [shape = 's32[]', space=sflag, size = 0x4, offset = 0, fixed_abs, tag = 'sflag constant byte address 0x0 - dummy sync flag']
  #allocation16 [shape = 's32[]', space=sflag, size = 0x4, offset = 0, fixed_abs, tag = 'sflag constant byte address 0x0 - dummy sync flag']
  #allocation17 [shape = 's32[]', space=sflag, size = 0x4, offset = 0, fixed_abs, tag = 'sflag constant byte address 0x0 - dummy sync flag']
  #allocation18 [shape = 's32[]', space=sflag, size = 0x4, offset = 0, fixed_abs, tag = 'sflag constant byte address 0x0 - dummy sync flag']
  #allocation19 [shape = 's32[]', space=sflag, size = 0x4, offset = 0, fixed_abs, tag = 'sflag constant byte address 0x0 - dummy sync flag']
  #allocation20 [shape = 's32[]', space=sflag, size = 0x4, offset = 0, fixed_abs, tag = 'sflag constant byte address 0x0 - dummy sync flag']
  #allocation21 [shape = 's32[]', space=sflag, size = 0x4, offset = 0, fixed_abs, tag = 'sflag constant byte address 0x0 - dummy sync flag']
  #allocation22 [shape = 's32[]', space=sflag, size = 0x4, offset = 0, fixed_abs, tag = 'sflag constant byte address 0x0 - dummy sync flag']
  #allocation23 [shape = 's32[]', space=sflag, size = 0x4, offset = 0, fixed_abs, tag = 'sflag constant byte address 0x0 - dummy sync flag']
  #allocation24 [shape = 's32[]', space=sflag, size = 0x4, offset = 0, fixed_abs, tag = 'sflag constant byte address 0x0 - dummy sync flag']
  #allocation25 [shape = 's32[]', space=sflag, size = 0x4, offset = 0, fixed_abs, tag = 'sflag constant byte address 0x0 - dummy sync flag']
  #allocation26 [shape = 's32[]', space=sflag, size = 0x4, offset = 0, fixed_abs, tag = 'sflag constant byte address 0x0 - dummy sync flag']
  #allocation27 [shape = 's32[]', space=sflag, size = 0x4, offset = 0, fixed_abs, tag = 'sflag constant byte address 0x0 - dummy sync flag']
  #allocation28 [shape = 's32[]', space=sflag, size = 0x4, offset = 0, fixed_abs, tag = 'sflag constant byte address 0x0 - dummy sync flag']
  #allocation29 [shape = 's32[]', space=sflag, size = 0x4, offset = 0, fixed_abs, tag = 'sflag constant byte address 0x0 - dummy sync flag']
  #allocation30 [shape = 's32[]', space=sflag, size = 0x4, offset = 0, fixed_abs, tag = 'sflag constant byte address 0x0 - dummy sync flag']
  #allocation31 [shape = 's32[]', space=sflag, size = 0x4, offset = 0, fixed_abs, tag = 'sflag constant byte address 0x0 - dummy sync flag']
  #allocation32 [shape = 's32[]', space=sflag, size = 0x4, offset = 0, fixed_abs, tag = 'sflag constant byte address 0x0 - dummy sync flag']
  #allocation33 [shape = 's32[]', space=sflag, size = 0x4, offset = 0, fixed_abs, tag = 'sflag constant byte address 0x0 - dummy sync flag']
  #allocation34 [shape = 's32[]', space=sflag, size = 0x4, offset = 0, fixed_abs, tag = 'sflag constant byte address 0x0 - dummy sync flag']
  #allocation35 [shape = 's32[]', space=sflag, size = 0x4, offset = 0, fixed_abs, tag = 'sflag constant byte address 0x0 - dummy sync flag']
  #allocation36 [shape = 's32[]', space=sflag, size = 0x4, offset = 0, fixed_abs, tag = 'sflag constant byte address 0x0 - dummy sync flag']
  #allocation37 [shape = 's32[]', space=sflag, size = 0x4, offset = 0, fixed_abs, tag = 'sflag constant byte address 0x0 - dummy sync flag']
  #allocation38 [shape = 's32[]', space=sflag, size = 0x4, offset = 0, fixed_abs, tag = 'sflag constant byte address 0x0 - dummy sync flag']
  #allocation39 [shape = 's32[]', space=sflag, size = 0x4, offset = 0, fixed_abs, tag = 'sflag constant byte address 0x0 - dummy sync flag']
  #allocation40 [shape = 's32[]', space=sflag, size = 0x4, offset = 0, fixed_abs, tag = 'sflag constant byte address 0x0 - dummy sync flag']
  #allocation41 [shape = 's32[]', space=sflag, size = 0x4, offset = 0, fixed_abs, tag = 'sflag constant byte address 0x0 - dummy sync flag']
  %s0 = inlined_call_operand.vmem [shape: s32[16], index: 0, kind: input, shape index: {}]
  %s1 = inlined_call_operand.hbm [shape: f32[64,128], index: 1, kind: input, shape index: {}]
  %s2 = inlined_call_operand.vmem [shape: s32[2,8,1], index: 2, kind: input, shape index: {}]
  %s3 = inlined_call_operand.vmem [shape: f32[3,128], index: 3, kind: input, shape index: {}]
  %s4 = inlined_call_operand.vmem [shape: f32[8,128], index: 4, kind: input, shape index: {}]
  %s5 = inlined_call_operand.hbm [shape: f32[2,8,128], index: 5, kind: output, shape index: {}]
  %s6 = sld [smem:[#allocation0]]
  $region117: #{tpu_custom_call.1} parent=0
    _
  %s8 = ssub.s32 1, %s6
  %s9 = scalar_select 0, %s8, %s6
  %s10 = sshll.u32 %s0, 4
  %s11 = int_to_ptr.vmem [resolvable:$true] %s10
  %13 = dma.vmem_to_smem %s11, 16, [#allocation5], [#allocation4]
  %14 = dma.done [#allocation4], 16
  %15 = sfence
  $region1: #{tpu_custom_call.1} parent=0
    #allocation6 [shape = 'u8[8192]{0}', space=vmem, size = 0x2000, scoped, tag = 'output window, operand 0']
    #allocation7 [shape = 's32[2]{0}', space=sflag, size = 0x8, scoped, tag = 'scoped memory for tpu_custom_call.1']
    %16 = vsyncpa [#allocation7], 0
    %s17 = scalar_lea.sflag [#allocation7], 1
    %18 = vsyncpa %s17, 0
    loop: start=0, step=1, limit=4
    $region2: #{tpu_custom_call.1} parent=1 // loop_pre_header
      _
    $region3: #{tpu_custom_call.1} parent=1 // loop_header
      %s20 = sphi 0, %s24
      %p21 = scmp.ge.s32.totalorder %s20, 4
      %s27 = sphi 0, %s39
      %s28 = sphi 0, %s35
      %s29 = sphi 0, %s27
      %s30 = sphi 0, %s28
      %s31 = sphi 0, %s29
      %s32 = sphi 0, %s30
      %s44 = sphi 0, %s46
      %s47 = sphi 0, %s44
      %s48 = sphi 0, %s47
      %s64 = sphi 0, %s48
      %s68 = sphi 0, %s68
      %s70 = sphi 0, %s68
      %s71 = sphi 0, %s70
      %s85 = sphi 0, %s71
      %s91 = sphi 0, %s93
      %s94 = sphi 0, %s91
      %s95 = sphi 0, %s94
      %s111 = sphi 0, %s95
      %s119 = sphi 0, %s121
      %s122 = sphi 0, %s119
      %s123 = sphi 0, %s122
      %s139 = sphi 0, %s123
    $region4: #{tpu_custom_call.1} parent=1 // loop_header_branch
      %23 = sbr.rel (%p21) target = $region8
    $region5: #{tpu_custom_call.1} parent=1 // loop_body
      %s25 = ssub.s32 %s20, 1
      %s26 = ssub.s32 %s20, 2
      %s33 = sadd.s32 1, %s28
      %p34 = scmp.ge.s32.totalorder %s33, 1
      %s35 = scalar_select %p34, 0, %s33
      %s36 = sadd.s32 1, %s27
      %s37 = scalar_select %p34, %s36, %s27
      %p38 = scmp.ge.s32.totalorder %s37, 2
      %s39 = scalar_select %p38, 0, %s37
      %s40 = ssub.s32 %s27, %s39
      %s41 = ssub.s32 %s28, %s35
      %s42 = sor.u32 %s40, %s41
      %p43 = scmp.eq.s32.totalorder %s42, 0
      %s45 = sadd.s32 %s44, 1
      %s46 = scalar_select %p43, %s44, %s45
      %p49 = pneg %p43
      %p50 = scmp.eq.s32.totalorder %s20, 1
      %p51 = por %p49, %p50
      %p52 = scmp.ne.s32.totalorder %s44, %s47
      %p53 = scmp.eq.s32.totalorder %s20, 0
      %p54 = por %p52, %p53
      %p55 = scmp.ne.s32.totalorder %s44, %s47
      %p56 = scmp.eq.s32.totalorder %s25, 1
      %p57 = por %p55, %p56
      %p58 = scmp.ne.s32.totalorder %s47, %s48
      %p59 = scmp.eq.s32.totalorder %s25, 0
      %p60 = por %p58, %p59
      %p61 = scmp.ne.s32.totalorder %s47, %s48
      %p62 = scmp.eq.s32.totalorder %s26, 1
      %p63 = por %p61, %p62
      %p65 = scmp.ne.s32.totalorder %s48, %s64
      %p66 = scmp.eq.s32.totalorder %s26, 0
      %p67 = por %p65, %p66
      %s69 = sadd.s32 %s68, 1
      %p72 = scmp.eq.s32.totalorder %s20, 1
      %p73 = scmp.ne.s32.totalorder %s68, %s70
      %p74 = scmp.eq.s32.totalorder %s20, 0
      %p75 = por %p73, %p74
      %p76 = scmp.ne.s32.totalorder %s68, %s70
      %p77 = scmp.eq.s32.totalorder %s25, 1
      %p78 = por %p76, %p77
      %p79 = scmp.ne.s32.totalorder %s70, %s71
      %p80 = scmp.eq.s32.totalorder %s25, 0
      %p81 = por %p79, %p80
      %p82 = scmp.ne.s32.totalorder %s70, %s71
      %p83 = scmp.eq.s32.totalorder %s26, 1
      %p84 = por %p82, %p83
      %p86 = scmp.ne.s32.totalorder %s71, %s85
      %p87 = scmp.eq.s32.totalorder %s26, 0
      %p88 = por %p86, %p87
      %s89 = ssub.s32 %s28, %s35
      %p90 = scmp.eq.s32.totalorder %s89, 0
      %s92 = sadd.s32 %s91, 1
      %s93 = scalar_select %p90, %s91, %s92
      %p96 = pneg %p90
      %p97 = scmp.eq.s32.totalorder %s20, 1
      %p98 = por %p96, %p97
      %p99 = scmp.ne.s32.totalorder %s91, %s94
      %p100 = scmp.eq.s32.totalorder %s20, 0
      %p101 = por %p99, %p100
      %p102 = scmp.ne.s32.totalorder %s91, %s94
      %p103 = scmp.eq.s32.totalorder %s25, 1
      %p104 = por %p102, %p103
      %p105 = scmp.ne.s32.totalorder %s94, %s95
      %p106 = scmp.eq.s32.totalorder %s25, 0
      %p107 = por %p105, %p106
      %p108 = scmp.ne.s32.totalorder %s94, %s95
      %p109 = scmp.eq.s32.totalorder %s26, 1
      %p110 = por %p108, %p109
      %p112 = scmp.ne.s32.totalorder %s95, %s111
      %p113 = scmp.eq.s32.totalorder %s26, 0
      %p114 = por %p112, %p113
      %s115 = ssub.s32 %s27, %s39
      %s116 = ssub.s32 %s28, %s35
      %s117 = sor.u32 %s115, %s116
      %p118 = scmp.eq.s32.totalorder %s117, 0
      %s120 = sadd.s32 %s119, 1
      %s121 = scalar_select %p118, %s119, %s120
      %p124 = pneg %p118
      %p125 = scmp.eq.s32.totalorder %s20, 1
      %p126 = por %p124, %p125
      %p127 = scmp.ne.s32.totalorder %s119, %s122
      %p128 = scmp.eq.s32.totalorder %s20, 0
      %p129 = por %p127, %p128
      %p130 = scmp.ne.s32.totalorder %s119, %s122
      %p131 = scmp.eq.s32.totalorder %s25, 1
      %p132 = por %p130, %p131
      %p133 = scmp.ne.s32.totalorder %s122, %s123
      %p134 = scmp.eq.s32.totalorder %s25, 0
      %p135 = por %p133, %p134
      %p136 = scmp.ne.s32.totalorder %s122, %s123
      %p137 = scmp.eq.s32.totalorder %s26, 1
      %p138 = por %p136, %p137
      %p140 = scmp.ne.s32.totalorder %s123, %s139
      %p141 = scmp.eq.s32.totalorder %s26, 0
      %p142 = por %p140, %p141
      %p143 = scmp.le.s32.totalorder 1, %s20
      %p144 = scmp.lt.s32.totalorder %s20, 3
      %p145 = pnand %p143, %p144
      %p146 = pneg %p145
      // Predicated region
      $region9: #{tpu_custom_call.1} parent=5 // pred_check
        _
      $region10: #{tpu_custom_call.1} parent=5 // pred_check_branch
        %148 = sbr.rel (%p145) target = $region12
      $region11: #{tpu_custom_call.1} parent=5 // pred_region
        %s149 = ssub.s32 %s20, 1
        // Predicated region
        $region13: #{tpu_custom_call.1} parent=11 // pred_check
          %p150 = pneg %p81
        $region14: #{tpu_custom_call.1} parent=11 // pred_check_branch
          %152 = sbr.rel (%p150) target = $region16
        $region15: #{tpu_custom_call.1} parent=11 // pred_region
          _
        $region16: #{tpu_custom_call.1} parent=11 // pred_fallthru
          _
        // Predicated region
        $region17: #{tpu_custom_call.1} parent=11 // pred_check
          %p153 = pneg %p107
        $region18: #{tpu_custom_call.1} parent=11 // pred_check_branch
          %155 = sbr.rel (%p153) target = $region20
        $region19: #{tpu_custom_call.1} parent=11 // pred_region
          %p156 = scmp.lt.s32.totalorder %s30, 0
          %s157 = scalar_select %p156, %s30, 0
          %s158 = smul.addr %s157, 8
          %s159 = scalar_lea.vmem %s4, %s158
        $region20: #{tpu_custom_call.1} parent=11 // pred_fallthru
          _
      $region12: #{tpu_custom_call.1} parent=5 // pred_fallthru
        _
      %p160 = scmp.lt.s32.totalorder %s20, 2
      // Predicated region
      $region21: #{tpu_custom_call.1} parent=5 // pred_check
        %p161 = pneg %p160
      $region22: #{tpu_custom_call.1} parent=5 // pred_check_branch
        %163 = sbr.rel (%p161) target = $region24
      $region23: #{tpu_custom_call.1} parent=5 // pred_region
        // Predicated region
        $region25: #{tpu_custom_call.1} parent=23 // pred_check
          %p164 = pneg %p54
        $region26: #{tpu_custom_call.1} parent=23 // pred_check_branch
          %166 = sbr.rel (%p164) target = $region28
        $region27: #{tpu_custom_call.1} parent=23 // pred_region
          %p167 = scmp.lt.s32.totalorder %s27, 1
          %s168 = scalar_select %p167, %s27, 1
          %p169 = scmp.lt.s32.totalorder %s28, 0
          %s170 = scalar_select %p169, %s28, 0
          %s171 = sadd.s32 %s170, %s168
          %s172 = smul.addr %s171, 8
          %s173 = scalar_lea.vmem %s2, %s172
        $region28: #{tpu_custom_call.1} parent=23 // pred_fallthru
          _
      $region24: #{tpu_custom_call.1} parent=5 // pred_fallthru
        _
      %p174 = scmp.le.s32.totalorder 1, %s20
      %p175 = scmp.lt.s32.totalorder %s20, 3
      %p176 = pnand %p174, %p175
      %p177 = pneg %p176
      // Predicated region
      $region29: #{tpu_custom_call.1} parent=5 // pred_check
        _
      $region30: #{tpu_custom_call.1} parent=5 // pred_check_branch
        %179 = sbr.rel (%p176) target = $region32
      $region31: #{tpu_custom_call.1} parent=5 // pred_region
        %s180 = ssub.s32 %s20, 1
        %p181 = scmp.lt.s32.totalorder %s29, 1
        %s182 = scalar_select %p181, %s29, 1
        %p183 = scmp.lt.s32.totalorder %s30, 0
        %s184 = scalar_select %p183, %s30, 0
        %s185 = sadd.s32 %s184, %s182
        %s186 = smul.addr %s185, 8
        %s187 = scalar_lea.vmem %s2, %s186
        %p188 = pneg %p60
        %p189 = pneg %p57
        %p190 = pneg %p81
        %p191 = pneg %p78
        %p192 = scmp.lt.s32.totalorder %s30, 0
        %s193 = scalar_select %p192, %s30, 0
        %s194 = smul.addr %s193, 8
        %s195 = scalar_lea.vmem %s4, %s194
        %p196 = pneg %p107
        %p197 = pneg %p104
        %p198 = pneg %p135
        %p199 = pneg %p132
        %s200 = sand.u32 %s122, 1
        %s201 = scalar_lea.sflag [#allocation7], %s200
        %s202 = sand.u32 %s122, 1
        %s203 = smul.addr %s202, 8
        %s204 = scalar_lea.vmem [#allocation6], %s203
        %p205 = scmp.lt.s32.totalorder %s29, 1
        %s206 = scalar_select %p205, %s29, 1
        %p207 = scmp.lt.s32.totalorder %s30, 0
        %s208 = scalar_select %p207, %s30, 0
        %s209 = sadd.s32 %s208, %s206
        %s210 = smul.addr %s209, 8
        %s211 = scalar_lea.vmem %s2, %s210
        %p212 = scmp.lt.s32.totalorder %s30, 0
        %s213 = scalar_select %p212, %s30, 0
        %s214 = smul.addr %s213, 8
        %s215 = scalar_lea.vmem %s4, %s214
        %p216 = scmp.lt.s32.totalorder %s30, 0
        %s217 = ssub.s32 0, %s30
        %s218 = scalar_select %p216, %s217, %s30
        %s219 = sand.u32 %s218, 1
        %s220 = ssub.s32 0, %s219
        %s221 = scalar_select %p216, %s220, %s219
        %p222 = scmp.ne.s32.totalorder %s221, 0
        %p223 = scmp.lt.s32.totalorder %s221, 0
        %p224 = pnand %p223, %p222
        %p225 = pneg %p224
        %s226 = sadd.s32 %s221, 2
        %s227 = scalar_select %p225, %s226, %s221
        %s228 = sadd.s32 %s29, %s30
        %s229 = smul.u32 %s228, 8
        %s230 = sadd.s32 %s229, 8
        %p231 = scmp.eq.s32.totalorder %s30, 0
        // Predicated region
        $region33: #{tpu_custom_call.1} parent=31 // pred_check
          %p232 = pneg %p231
        $region34: #{tpu_custom_call.1} parent=31 // pred_check_branch
          %234 = sbr.rel (%p232) target = $region36
        $region35: #{tpu_custom_call.1} parent=31 // pred_region
          %s235 = sld [smem:[#allocation5 + %s229]]
          %s236 = smul.addr %s235, 16
          %s237 = scalar_lea.hbm %s1, %s236
          %s238 = smul.u32 %s227, 8
          %s239 = scalar_lea.vmem [#allocation2], %s238
          %s240 = scalar_lea.sflag [#allocation3], %s238
          // Predicated region
          $region37: #{tpu_custom_call.1} parent=35 // pred_check
            _
          $region38: #{tpu_custom_call.1} parent=35 // pred_check_branch
            %242 = sbr.rel target = $region40
          $region39: #{tpu_custom_call.1} parent=35 // pred_region
            %243 = sst [smem:[#allocation10]] [#allocation9]
            %244 = sst [smem:[#allocation11]] [#allocation8]
          $region40: #{tpu_custom_call.1} parent=35 // pred_fallthru
            _
          %246 = shalt.err (0)
          %s248 = sshll.u32 %s239, 4
          %s249 = int_to_ptr.vmem [resolvable:$true] %s248
          %251 = dma.hbm_to_vmem [thread:$0]  %s237, 16, %s249, %s240
          %s252 = sadd.s32 %s229, 1
          %s253 = sld [smem:[#allocation5 + %s252]]
          %s254 = smul.addr %s253, 16
          %s255 = scalar_lea.hbm %s1, %s254
          %s256 = sadd.s32 1, %s238
          %s257 = scalar_lea.vmem [#allocation2], %s256
          %s258 = scalar_lea.sflag [#allocation3], %s256
          // Predicated region
          $region41: #{tpu_custom_call.1} parent=35 // pred_check
            _
          $region42: #{tpu_custom_call.1} parent=35 // pred_check_branch
            %260 = sbr.rel target = $region44
          $region43: #{tpu_custom_call.1} parent=35 // pred_region
            %261 = sst [smem:[#allocation10]] [#allocation13]
            %262 = sst [smem:[#allocation11]] [#allocation12]
          $region44: #{tpu_custom_call.1} parent=35 // pred_fallthru
            _
          %264 = shalt.err (0)
          %s266 = sshll.u32 %s257, 4
          %s267 = int_to_ptr.vmem [resolvable:$true] %s266
          %269 = dma.hbm_to_vmem [thread:$0]  %s255, 16, %s267, %s258
          %s270 = sadd.s32 %s229, 2
          %s271 = sld [smem:[#allocation5 + %s270]]
          %s272 = smul.addr %s271, 16
          %s273 = scalar_lea.hbm %s1, %s272
          %s274 = sadd.s32 2, %s238
          %s275 = scalar_lea.vmem [#allocation2], %s274
          %s276 = scalar_lea.sflag [#allocation3], %s274
          // Predicated region
          $region45: #{tpu_custom_call.1} parent=35 // pred_check
            _
          $region46: #{tpu_custom_call.1} parent=35 // pred_check_branch
            %278 = sbr.rel target = $region48
          $region47: #{tpu_custom_call.1} parent=35 // pred_region
            %279 = sst [smem:[#allocation10]] [#allocation15]
            %280 = sst [smem:[#allocation11]] [#allocation14]
          $region48: #{tpu_custom_call.1} parent=35 // pred_fallthru
            _
          %282 = shalt.err (0)
          %s284 = sshll.u32 %s275, 4
          %s285 = int_to_ptr.vmem [resolvable:$true] %s284
          %287 = dma.hbm_to_vmem [thread:$0]  %s273, 16, %s285, %s276
          %s288 = sadd.s32 %s229, 3
          %s289 = sld [smem:[#allocation5 + %s288]]
          %s290 = smul.addr %s289, 16
          %s291 = scalar_lea.hbm %s1, %s290
          %s292 = sadd.s32 3, %s238
          %s293 = scalar_lea.vmem [#allocation2], %s292
          %s294 = scalar_lea.sflag [#allocation3], %s292
          // Predicated region
          $region49: #{tpu_custom_call.1} parent=35 // pred_check
            _
          $region50: #{tpu_custom_call.1} parent=35 // pred_check_branch
            %296 = sbr.rel target = $region52
          $region51: #{tpu_custom_call.1} parent=35 // pred_region
            %297 = sst [smem:[#allocation10]] [#allocation17]
            %298 = sst [smem:[#allocation11]] [#allocation16]
          $region52: #{tpu_custom_call.1} parent=35 // pred_fallthru
            _
          %300 = shalt.err (0)
          %s302 = sshll.u32 %s293, 4
          %s303 = int_to_ptr.vmem [resolvable:$true] %s302
          %305 = dma.hbm_to_vmem [thread:$0]  %s291, 16, %s303, %s294
          %s306 = sadd.s32 %s229, 4
          %s307 = sld [smem:[#allocation5 + %s306]]
          %s308 = smul.addr %s307, 16
          %s309 = scalar_lea.hbm %s1, %s308
          %s310 = sadd.s32 4, %s238
          %s311 = scalar_lea.vmem [#allocation2], %s310
          %s312 = scalar_lea.sflag [#allocation3], %s310
          // Predicated region
          $region53: #{tpu_custom_call.1} parent=35 // pred_check
            _
          $region54: #{tpu_custom_call.1} parent=35 // pred_check_branch
            %314 = sbr.rel target = $region56
          $region55: #{tpu_custom_call.1} parent=35 // pred_region
            %315 = sst [smem:[#allocation10]] [#allocation19]
            %316 = sst [smem:[#allocation11]] [#allocation18]
          $region56: #{tpu_custom_call.1} parent=35 // pred_fallthru
            _
          %318 = shalt.err (0)
          %s320 = sshll.u32 %s311, 4
          %s321 = int_to_ptr.vmem [resolvable:$true] %s320
          %323 = dma.hbm_to_vmem [thread:$0]  %s309, 16, %s321, %s312
          %s324 = sadd.s32 %s229, 5
          %s325 = sld [smem:[#allocation5 + %s324]]
          %s326 = smul.addr %s325, 16
          %s327 = scalar_lea.hbm %s1, %s326
          %s328 = sadd.s32 5, %s238
          %s329 = scalar_lea.vmem [#allocation2], %s328
          %s330 = scalar_lea.sflag [#allocation3], %s328
          // Predicated region
          $region57: #{tpu_custom_call.1} parent=35 // pred_check
            _
          $region58: #{tpu_custom_call.1} parent=35 // pred_check_branch
            %332 = sbr.rel target = $region60
          $region59: #{tpu_custom_call.1} parent=35 // pred_region
            %333 = sst [smem:[#allocation10]] [#allocation21]
            %334 = sst [smem:[#allocation11]] [#allocation20]
          $region60: #{tpu_custom_call.1} parent=35 // pred_fallthru
            _
          %336 = shalt.err (0)
          %s338 = sshll.u32 %s329, 4
          %s339 = int_to_ptr.vmem [resolvable:$true] %s338
          %341 = dma.hbm_to_vmem [thread:$0]  %s327, 16, %s339, %s330
          %s342 = sadd.s32 %s229, 6
          %s343 = sld [smem:[#allocation5 + %s342]]
          %s344 = smul.addr %s343, 16
          %s345 = scalar_lea.hbm %s1, %s344
          %s346 = sadd.s32 6, %s238
          %s347 = scalar_lea.vmem [#allocation2], %s346
          %s348 = scalar_lea.sflag [#allocation3], %s346
          // Predicated region
          $region61: #{tpu_custom_call.1} parent=35 // pred_check
            _
          $region62: #{tpu_custom_call.1} parent=35 // pred_check_branch
            %350 = sbr.rel target = $region64
          $region63: #{tpu_custom_call.1} parent=35 // pred_region
            %351 = sst [smem:[#allocation10]] [#allocation23]
            %352 = sst [smem:[#allocation11]] [#allocation22]
          $region64: #{tpu_custom_call.1} parent=35 // pred_fallthru
            _
          %354 = shalt.err (0)
          %s356 = sshll.u32 %s347, 4
          %s357 = int_to_ptr.vmem [resolvable:$true] %s356
          %359 = dma.hbm_to_vmem [thread:$0]  %s345, 16, %s357, %s348
          %s360 = sadd.s32 %s229, 7
          %s361 = sld [smem:[#allocation5 + %s360]]
          %s362 = smul.addr %s361, 16
          %s363 = scalar_lea.hbm %s1, %s362
          %s364 = sadd.s32 7, %s238
          %s365 = scalar_lea.vmem [#allocation2], %s364
          %s366 = scalar_lea.sflag [#allocation3], %s364
          // Predicated region
          $region65: #{tpu_custom_call.1} parent=35 // pred_check
            _
          $region66: #{tpu_custom_call.1} parent=35 // pred_check_branch
            %368 = sbr.rel target = $region68
          $region67: #{tpu_custom_call.1} parent=35 // pred_region
            %369 = sst [smem:[#allocation10]] [#allocation25]
            %370 = sst [smem:[#allocation11]] [#allocation24]
          $region68: #{tpu_custom_call.1} parent=35 // pred_fallthru
            _
          %372 = shalt.err (0)
          %s374 = sshll.u32 %s365, 4
          %s375 = int_to_ptr.vmem [resolvable:$true] %s374
          %377 = dma.hbm_to_vmem [thread:$0]  %s363, 16, %s375, %s366
        $region36: #{tpu_custom_call.1} parent=31 // pred_fallthru
          _
        %s378 = sadd.s32 %s30, 1
        %p379 = scmp.lt.s32.totalorder %s378, 1
        // Predicated region
        $region69: #{tpu_custom_call.1} parent=31 // pred_check
          %p380 = pneg %p379
        $region70: #{tpu_custom_call.1} parent=31 // pred_check_branch
          %382 = sbr.rel (%p380) target = $region72
        $region71: #{tpu_custom_call.1} parent=31 // pred_region
          %s383 = ssub.s32 1, %s227
          %s384 = sld [smem:[#allocation5 + %s230]]
          %s385 = smul.addr %s384, 16
          %s386 = scalar_lea.hbm %s1, %s385
          %s387 = smul.u32 %s383, 8
          %s388 = scalar_lea.vmem [#allocation2], %s387
          %s389 = scalar_lea.sflag [#allocation3], %s387
          // Predicated region
          $region73: #{tpu_custom_call.1} parent=71 // pred_check
            _
          $region74: #{tpu_custom_call.1} parent=71 // pred_check_branch
            %391 = sbr.rel target = $region76
          $region75: #{tpu_custom_call.1} parent=71 // pred_region
            %392 = sst [smem:[#allocation10]] [#allocation27]
            %393 = sst [smem:[#allocation11]] [#allocation26]
          $region76: #{tpu_custom_call.1} parent=71 // pred_fallthru
            _
          %395 = shalt.err (0)
          %s397 = sshll.u32 %s388, 4
          %s398 = int_to_ptr.vmem [resolvable:$true] %s397
          %400 = dma.hbm_to_vmem [thread:$0]  %s386, 16, %s398, %s389
          %s401 = sadd.s32 %s229, 9
          %s402 = sld [smem:[#allocation5 + %s401]]
          %s403 = smul.addr %s402, 16
          %s404 = scalar_lea.hbm %s1, %s403
          %s405 = sadd.s32 1, %s387
          %s406 = scalar_lea.vmem [#allocation2], %s405
          %s407 = scalar_lea.sflag [#allocation3], %s405
          // Predicated region
          $region77: #{tpu_custom_call.1} parent=71 // pred_check
            _
          $region78: #{tpu_custom_call.1} parent=71 // pred_check_branch
            %409 = sbr.rel target = $region80
          $region79: #{tpu_custom_call.1} parent=71 // pred_region
            %410 = sst [smem:[#allocation10]] [#allocation29]
            %411 = sst [smem:[#allocation11]] [#allocation28]
          $region80: #{tpu_custom_call.1} parent=71 // pred_fallthru
            _
          %413 = shalt.err (0)
          %s415 = sshll.u32 %s406, 4
          %s416 = int_to_ptr.vmem [resolvable:$true] %s415
          %418 = dma.hbm_to_vmem [thread:$0]  %s404, 16, %s416, %s407
          %s419 = sadd.s32 %s229, 10
          %s420 = sld [smem:[#allocation5 + %s419]]
          %s421 = smul.addr %s420, 16
          %s422 = scalar_lea.hbm %s1, %s421
          %s423 = sadd.s32 2, %s387
          %s424 = scalar_lea.vmem [#allocation2], %s423
          %s425 = scalar_lea.sflag [#allocation3], %s423
          // Predicated region
          $region81: #{tpu_custom_call.1} parent=71 // pred_check
            _
          $region82: #{tpu_custom_call.1} parent=71 // pred_check_branch
            %427 = sbr.rel target = $region84
          $region83: #{tpu_custom_call.1} parent=71 // pred_region
            %428 = sst [smem:[#allocation10]] [#allocation31]
            %429 = sst [smem:[#allocation11]] [#allocation30]
          $region84: #{tpu_custom_call.1} parent=71 // pred_fallthru
            _
          %431 = shalt.err (0)
          %s433 = sshll.u32 %s424, 4
          %s434 = int_to_ptr.vmem [resolvable:$true] %s433
          %436 = dma.hbm_to_vmem [thread:$0]  %s422, 16, %s434, %s425
          %s437 = sadd.s32 %s229, 11
          %s438 = sld [smem:[#allocation5 + %s437]]
          %s439 = smul.addr %s438, 16
          %s440 = scalar_lea.hbm %s1, %s439
          %s441 = sadd.s32 3, %s387
          %s442 = scalar_lea.vmem [#allocation2], %s441
          %s443 = scalar_lea.sflag [#allocation3], %s441
          // Predicated region
          $region85: #{tpu_custom_call.1} parent=71 // pred_check
            _
          $region86: #{tpu_custom_call.1} parent=71 // pred_check_branch
            %445 = sbr.rel target = $region88
          $region87: #{tpu_custom_call.1} parent=71 // pred_region
            %446 = sst [smem:[#allocation10]] [#allocation33]
            %447 = sst [smem:[#allocation11]] [#allocation32]
          $region88: #{tpu_custom_call.1} parent=71 // pred_fallthru
            _
          %449 = shalt.err (0)
          %s451 = sshll.u32 %s442, 4
          %s452 = int_to_ptr.vmem [resolvable:$true] %s451
          %454 = dma.hbm_to_vmem [thread:$0]  %s440, 16, %s452, %s443
          %s455 = sadd.s32 %s229, 12
          %s456 = sld [smem:[#allocation5 + %s455]]
          %s457 = smul.addr %s456, 16
          %s458 = scalar_lea.hbm %s1, %s457
          %s459 = sadd.s32 4, %s387
          %s460 = scalar_lea.vmem [#allocation2], %s459
          %s461 = scalar_lea.sflag [#allocation3], %s459
          // Predicated region
          $region89: #{tpu_custom_call.1} parent=71 // pred_check
            _
          $region90: #{tpu_custom_call.1} parent=71 // pred_check_branch
            %463 = sbr.rel target = $region92
          $region91: #{tpu_custom_call.1} parent=71 // pred_region
            %464 = sst [smem:[#allocation10]] [#allocation35]
            %465 = sst [smem:[#allocation11]] [#allocation34]
          $region92: #{tpu_custom_call.1} parent=71 // pred_fallthru
            _
          %467 = shalt.err (0)
          %s469 = sshll.u32 %s460, 4
          %s470 = int_to_ptr.vmem [resolvable:$true] %s469
          %472 = dma.hbm_to_vmem [thread:$0]  %s458, 16, %s470, %s461
          %s473 = sadd.s32 %s229, 13
          %s474 = sld [smem:[#allocation5 + %s473]]
          %s475 = smul.addr %s474, 16
          %s476 = scalar_lea.hbm %s1, %s475
          %s477 = sadd.s32 5, %s387
          %s478 = scalar_lea.vmem [#allocation2], %s477
          %s479 = scalar_lea.sflag [#allocation3], %s477
          // Predicated region
          $region93: #{tpu_custom_call.1} parent=71 // pred_check
            _
          $region94: #{tpu_custom_call.1} parent=71 // pred_check_branch
            %481 = sbr.rel target = $region96
          $region95: #{tpu_custom_call.1} parent=71 // pred_region
            %482 = sst [smem:[#allocation10]] [#allocation37]
            %483 = sst [smem:[#allocation11]] [#allocation36]
          $region96: #{tpu_custom_call.1} parent=71 // pred_fallthru
            _
          %485 = shalt.err (0)
          %s487 = sshll.u32 %s478, 4
          %s488 = int_to_ptr.vmem [resolvable:$true] %s487
          %490 = dma.hbm_to_vmem [thread:$0]  %s476, 16, %s488, %s479
          %s491 = sadd.s32 %s229, 14
          %s492 = sld [smem:[#allocation5 + %s491]]
          %s493 = smul.addr %s492, 16
          %s494 = scalar_lea.hbm %s1, %s493
          %s495 = sadd.s32 6, %s387
          %s496 = scalar_lea.vmem [#allocation2], %s495
          %s497 = scalar_lea.sflag [#allocation3], %s495
          // Predicated region
          $region97: #{tpu_custom_call.1} parent=71 // pred_check
            _
          $region98: #{tpu_custom_call.1} parent=71 // pred_check_branch
            %499 = sbr.rel target = $region100
          $region99: #{tpu_custom_call.1} parent=71 // pred_region
            %500 = sst [smem:[#allocation10]] [#allocation39]
            %501 = sst [smem:[#allocation11]] [#allocation38]
          $region100: #{tpu_custom_call.1} parent=71 // pred_fallthru
            _
          %503 = shalt.err (0)
          %s505 = sshll.u32 %s496, 4
          %s506 = int_to_ptr.vmem [resolvable:$true] %s505
          %508 = dma.hbm_to_vmem [thread:$0]  %s494, 16, %s506, %s497
          %s509 = sadd.s32 %s229, 15
          %s510 = sld [smem:[#allocation5 + %s509]]
          %s511 = smul.addr %s510, 16
          %s512 = scalar_lea.hbm %s1, %s511
          %s513 = sadd.s32 7, %s387
          %s514 = scalar_lea.vmem [#allocation2], %s513
          %s515 = scalar_lea.sflag [#allocation3], %s513
          // Predicated region
          $region101: #{tpu_custom_call.1} parent=71 // pred_check
            _
          $region102: #{tpu_custom_call.1} parent=71 // pred_check_branch
            %517 = sbr.rel target = $region104
          $region103: #{tpu_custom_call.1} parent=71 // pred_region
            %518 = sst [smem:[#allocation10]] [#allocation41]
            %519 = sst [smem:[#allocation11]] [#allocation40]
          $region104: #{tpu_custom_call.1} parent=71 // pred_fallthru
            _
          %521 = shalt.err (0)
          %s523 = sshll.u32 %s514, 4
          %s524 = int_to_ptr.vmem [resolvable:$true] %s523
          %526 = dma.hbm_to_vmem [thread:$0]  %s512, 16, %s524, %s515
        $region72: #{tpu_custom_call.1} parent=31 // pred_fallthru
          _
        %v527 = vld [vmem:[%s211] sm:$0xff]
        %v528 = vld [vmem:[%s3] sm:$0x7]
        %vm529 = vcmp.eq.s32.totalorder %v527, 0
        %vm530 = vcmp.eq.s32.totalorder %v527, 1
        %v531 = vsel %vm530, 1, 0
        %532 = vset.pattern.permute.xlu0 0
        %533 = vperm.xlu0 %532, %v531
        %v534 = vpop.permute.xlu0 %533
        %vm535 = vcmp.eq.s32.totalorder %v534, 1
        %v536 = vlaneseq
        %v537 = vshrl.u32 %v536, 7
        %v538 = vsub.s32 1, %v537
        %v539 = vrot.slane %v528, %v538
        %v540 = vlaneseq
        %v541 = vshrl.u32 %v540, 7
        %v542 = vsub.s32 2, %v541
        %v543 = vrot.slane %v528, %v542
        %v544 = vsel %vm535, %v539, %v543
        %v545 = vsel %vm529, 1, 0
        %546 = vset.pattern.permute.xlu0 0
        %547 = vperm.xlu0 %546, %v545
        %v548 = vpop.permute.xlu0 %547
        %vm549 = vcmp.eq.s32.totalorder %v548, 1
        %v550 = vlaneseq
        %v551 = vshrl.u32 %v550, 7
        %v552 = vsub.s32 0, %v551
        %v553 = vrot.slane %v528, %v552
        %v554 = vsel %vm549, %v553, %v544
        %v555 = vld [vmem:[%s215] sm:$0xff]
        %v556 = vadd.f32 %v554, %v555
        %s557 = smul.u32 %s227, 8
        %s558 = scalar_lea.sflag [#allocation3], %s557
        %560 = dma.done %s558, 16
        %s561 = sadd.s32 1, %s557
        %s562 = scalar_lea.sflag [#allocation3], %s561
        %564 = dma.done %s562, 16
        %s565 = sadd.s32 2, %s557
        %s566 = scalar_lea.sflag [#allocation3], %s565
        %568 = dma.done %s566, 16
        %s569 = sadd.s32 3, %s557
        %s570 = scalar_lea.sflag [#allocation3], %s569
        %572 = dma.done %s570, 16
        %s573 = sadd.s32 4, %s557
        %s574 = scalar_lea.sflag [#allocation3], %s573
        %576 = dma.done %s574, 16
        %s577 = sadd.s32 5, %s557
        %s578 = scalar_lea.sflag [#allocation3], %s577
        %580 = dma.done %s578, 16
        %s581 = sadd.s32 6, %s557
        %s582 = scalar_lea.sflag [#allocation3], %s581
        %584 = dma.done %s582, 16
        %s585 = sadd.s32 7, %s557
        %s586 = scalar_lea.sflag [#allocation3], %s585
        %588 = dma.done %s586, 16
        %s589 = scalar_lea.vmem [#allocation2], %s557
        %v590 = vld [vmem:[%s589] sm:$0xff]
        %v591 = vadd.f32 %v590, %v556
        %592 = vst [vmem:[%s204] sm:$0xff] %v591
        %s593 = sand.u32 %s122, 1
        %s594 = scalar_lea.sflag [#allocation7], %s593
        %s595 = sand.u32 %s122, 1
        %s596 = smul.addr %s595, 8
        %s597 = scalar_lea.vmem [#allocation6], %s596
        // Predicated region
        $region105: #{tpu_custom_call.1} parent=31 // pred_check
          %p598 = pneg %p132
        $region106: #{tpu_custom_call.1} parent=31 // pred_check_branch
          %600 = sbr.rel (%p598) target = $region108
        $region107: #{tpu_custom_call.1} parent=31 // pred_region
          %s602 = ssub.s32 128, 128
          %603 = vsyncadd %s594, %s602
          %s604 = sadd.s32 %s30, %s29
          %s605 = smul.addr %s604, 128
          %s606 = scalar_lea.hbm %s5, %s605
          %s608 = sshll.u32 %s597, 4
          %s609 = int_to_ptr.vmem [resolvable:$true] %s608
          %611 = dma.vmem_to_hbm [thread:$0]  %s609, 128, %s606, %s594
        $region108: #{tpu_custom_call.1} parent=31 // pred_fallthru
          _
      $region32: #{tpu_custom_call.1} parent=5 // pred_fallthru
        _
      %p612 = scmp.le.s32.totalorder 2, %s20
      // Predicated region
      $region109: #{tpu_custom_call.1} parent=5 // pred_check
        %p613 = pneg %p612
      $region110: #{tpu_custom_call.1} parent=5 // pred_check_branch
        %615 = sbr.rel (%p613) target = $region112
      $region111: #{tpu_custom_call.1} parent=5 // pred_region
        %s616 = ssub.s32 %s20, 2
        // Predicated region
        $region113: #{tpu_custom_call.1} parent=111 // pred_check
          %p617 = pneg %p138
        $region114: #{tpu_custom_call.1} parent=111 // pred_check_branch
          %619 = sbr.rel (%p617) target = $region116
        $region115: #{tpu_custom_call.1} parent=111 // pred_region
          %s620 = sand.u32 %s123, 1
          %s621 = scalar_lea.sflag [#allocation7], %s620
          %s622 = sand.u32 %s123, 1
          %s623 = smul.addr %s622, 8
          %s624 = scalar_lea.vmem [#allocation6], %s623
          %625 = dma.done %s621, 128
        $region116: #{tpu_custom_call.1} parent=111 // pred_fallthru
          _
      $region112: #{tpu_custom_call.1} parent=5 // pred_fallthru
        _
    $region6: #{tpu_custom_call.1} parent=1 // loop_footer
      %s24 = sadd.s32 1, %s20
    $region7: #{tpu_custom_call.1} parent=1 // loop_footer_branch
      %19 = sbr.rel target = $region3
    $region8: #{tpu_custom_call.1} parent=1 // loop_exit
      _
    %626 = vsyncpa [#allocation7], 1
    %s627 = scalar_lea.sflag [#allocation7], 1
    %628 = vsyncpa %s627, 1
  %629 = vsyncmov [#allocation3]
  %s630 = vpop.sfrf %629
  %p631 = scmp.eq.s32.totalorder %s630, 0
  %p632 = pneg %p631
  %634 = shalt.err (%p632)
  %s635 = scalar_lea.sflag [#allocation3], 1
  %636 = vsyncmov %s635
  %s637 = vpop.sfrf %636
  %p638 = scmp.eq.s32.totalorder %s637, 0
  %p639 = pneg %p638
  %641 = shalt.err (%p639)
  %s642 = scalar_lea.sflag [#allocation3], 2
  %643 = vsyncmov %s642
  %s644 = vpop.sfrf %643
  %p645 = scmp.eq.s32.totalorder %s644, 0
  %p646 = pneg %p645
  %648 = shalt.err (%p646)
  %s649 = scalar_lea.sflag [#allocation3], 3
  %650 = vsyncmov %s649
  %s651 = vpop.sfrf %650
  %p652 = scmp.eq.s32.totalorder %s651, 0
  %p653 = pneg %p652
  %655 = shalt.err (%p653)
  %s656 = scalar_lea.sflag [#allocation3], 4
  %657 = vsyncmov %s656
  %s658 = vpop.sfrf %657
  %p659 = scmp.eq.s32.totalorder %s658, 0
  %p660 = pneg %p659
  %662 = shalt.err (%p660)
  %s663 = scalar_lea.sflag [#allocation3], 5
  %664 = vsyncmov %s663
  %s665 = vpop.sfrf %664
  %p666 = scmp.eq.s32.totalorder %s665, 0
  %p667 = pneg %p666
  %669 = shalt.err (%p667)
  %s670 = scalar_lea.sflag [#allocation3], 6
  %671 = vsyncmov %s670
  %s672 = vpop.sfrf %671
  %p673 = scmp.eq.s32.totalorder %s672, 0
  %p674 = pneg %p673
  %676 = shalt.err (%p674)
  %s677 = scalar_lea.sflag [#allocation3], 7
  %678 = vsyncmov %s677
  %s679 = vpop.sfrf %678
  %p680 = scmp.eq.s32.totalorder %s679, 0
  %p681 = pneg %p680
  %683 = shalt.err (%p681)
  %s684 = scalar_lea.sflag [#allocation3], 8
  %685 = vsyncmov %s684
  %s686 = vpop.sfrf %685
  %p687 = scmp.eq.s32.totalorder %s686, 0
  %p688 = pneg %p687
  %690 = shalt.err (%p688)
  %s691 = scalar_lea.sflag [#allocation3], 9
  %692 = vsyncmov %s691
  %s693 = vpop.sfrf %692
  %p694 = scmp.eq.s32.totalorder %s693, 0
  %p695 = pneg %p694
  %697 = shalt.err (%p695)
  %s698 = scalar_lea.sflag [#allocation3], 10
  %699 = vsyncmov %s698
  %s700 = vpop.sfrf %699
  %p701 = scmp.eq.s32.totalorder %s700, 0
  %p702 = pneg %p701
  %704 = shalt.err (%p702)
  %s705 = scalar_lea.sflag [#allocation3], 11
  %706 = vsyncmov %s705
  %s707 = vpop.sfrf %706
  %p708 = scmp.eq.s32.totalorder %s707, 0
  %p709 = pneg %p708
  %711 = shalt.err (%p709)
  %s712 = scalar_lea.sflag [#allocation3], 12
  %713 = vsyncmov %s712
  %s714 = vpop.sfrf %713
  %p715 = scmp.eq.s32.totalorder %s714, 0
  %p716 = pneg %p715
  %718 = shalt.err (%p716)
  %s719 = scalar_lea.sflag [#allocation3], 13
  %720 = vsyncmov %s719
  %s721 = vpop.sfrf %720
  %p722 = scmp.eq.s32.totalorder %s721, 0
  %p723 = pneg %p722
  %725 = shalt.err (%p723)
  %s726 = scalar_lea.sflag [#allocation3], 14
  %727 = vsyncmov %s726
  %s728 = vpop.sfrf %727
  %p729 = scmp.eq.s32.totalorder %s728, 0
  %p730 = pneg %p729
  %732 = shalt.err (%p730)
  %s733 = scalar_lea.sflag [#allocation3], 15
  %734 = vsyncmov %s733
  %s735 = vpop.sfrf %734
  %p736 = scmp.eq.s32.totalorder %s735, 0
  %p737 = pneg %p736
  %739 = shalt.err (%p737)

</llo_original>
